<compile_context>
chip_gen: v5e
topology: v5e:2x2
jax: 0.10.0
libtpu: 0.0.40
codegen_flags: <defaults>
</compile_context>

<pallas_src>
import functools

import jax
import jax.numpy as jnp
from jax.experimental import pallas as pl
from jax.experimental.pallas import tpu as pltpu


# ---------------------------------------------------------------------------
# Shared math helper (single-pass variance; PyTorch LayerNorm eps = 1e-5).
# ---------------------------------------------------------------------------
def _layer_norm(x, gamma, beta, eps=1e-5):
    mean = jnp.mean(x, axis=-1, keepdims=True)
    var = jnp.mean(x * x, axis=-1, keepdims=True) - mean * mean
    return (x - mean) * jax.lax.rsqrt(var + eps) * gamma + beta


# ---------------------------------------------------------------------------
# Pallas kernel: one grid step == one batch element.
# ---------------------------------------------------------------------------
def attention_layer_kernel(num_heads,
                           x_ref, wq_ref, wk_ref, wv_ref, bq_ref, bk_ref, bv_ref,
                           wo_ref, bo_ref, w1_ref, b1_ref, w2_ref, b2_ref,
                           ln_g_ref, ln_b_ref, out_ref):
    _, T, H = x_ref.shape
    G = wq_ref.shape[0]                     # 2 * num_heads (spatial heads, then temporal)

    gamma = ln_g_ref[...]                   # (1, H)
    beta = ln_b_ref[...]                    # (1, H)

    x = x_ref[0].astype(jnp.float32)        # (T, H)
    # One broadcast of x across all (branch, head) pairs, reused for q/k/v.
    xg = jnp.broadcast_to(x[None], (G, T, H))                         # (G, T, H)

    # Per-head in-projections (leading-batch 3-D einsums; lane axis = d, never split).
    q = jnp.einsum("gth,ghd->gtd", xg, wq_ref[...],
                   preferred_element_type=jnp.float32) + bq_ref[...][:, None, :]
    k = jnp.einsum("gth,ghd->gtd", xg, wk_ref[...],
                   preferred_element_type=jnp.float32) + bk_ref[...][:, None, :]
    v = jnp.einsum("gth,ghd->gtd", xg, wv_ref[...],
                   preferred_element_type=jnp.float32) + bv_ref[...][:, None, :]

    # Attention, batched over all (branch, head) pairs.
    s = jnp.einsum("gtd,gsd->gts", q, k, preferred_element_type=jnp.float32)
    s = s - jnp.max(s, axis=-1, keepdims=True)
    p = jnp.exp(s)
    p = p * (1.0 / jnp.sum(p, axis=-1, keepdims=True))   # one divide per row, then muls
    ctx = jnp.einsum("gts,gsd->gtd", p, v, preferred_element_type=jnp.float32)   # (G,T,d)

    # Per-head output projection, then sum heads within each branch (no block-diag
    # zero padding, no lane-axis merge of ctx).
    proj_h = jnp.einsum("gtd,gdh->gth", ctx, wo_ref[...],
                        preferred_element_type=jnp.float32)                      # (G,T,H)
    proj = (proj_h.reshape(2, num_heads, T, H).sum(axis=1)
            + bo_ref[...][:, None, :])                                           # (2,T,H)

    # Residual + fused LayerNorm over both branches, then combine.
    branches = _layer_norm(proj + x[None], gamma, beta)                          # (2,T,H)
    att = branches[0] + branches[1]                                              # (T,H)

    # Feedforward (no activation between linear1/linear2 in the reference module).
    h = jnp.dot(att, w1_ref[...], preferred_element_type=jnp.float32) + b1_ref[...]
    h = jnp.dot(h, w2_ref[...], preferred_element_type=jnp.float32) + b2_ref[...]

    out_ref[0] = _layer_norm(h + att, gamma, beta).astype(out_ref.dtype)


# ---------------------------------------------------------------------------
# Host-side parameter preprocessing (per-head layouts, folded query scale).
# ---------------------------------------------------------------------------
def _prepare_kernel_params(params, H, num_heads):
    d = H // num_heads
    scale = jnp.float32(1.0 / (d ** 0.5))

    def per_head_in(w_rows, b_rows, sc):
        # torch: y = x @ w_rows.T ; split output columns into heads.
        wt = w_rows.T.reshape(H, num_heads, d).transpose(1, 0, 2)   # (nh, H, d)
        bt = b_rows.reshape(num_heads, d)                           # (nh, d)
        return wt * sc, bt * sc

    def per_head_out(w):
        # torch: out = ctx_concat @ w.T ; head g consumes rows [g*d:(g+1)*d] of w.T.
        return w.T.reshape(num_heads, d, H)                         # (nh, d, H)

    wq_s, bq_s = per_head_in(params["s_in_w"][:H], params["s_in_b"][:H], scale)
    wq_t, bq_t = per_head_in(params["t_in_w"][:H], params["t_in_b"][:H], scale)
    wk_s, bk_s = per_head_in(params["s_in_w"][H:2 * H], params["s_in_b"][H:2 * H], 1.0)
    wk_t, bk_t = per_head_in(params["t_in_w"][H:2 * H], params["t_in_b"][H:2 * H], 1.0)
    wv_s, bv_s = per_head_in(params["s_in_w"][2 * H:], params["s_in_b"][2 * H:], 1.0)
    wv_t, bv_t = per_head_in(params["t_in_w"][2 * H:], params["t_in_b"][2 * H:], 1.0)

    wq = jnp.concatenate([wq_s, wq_t], axis=0)                      # (G, H, d)
    wk = jnp.concatenate([wk_s, wk_t], axis=0)
    wv = jnp.concatenate([wv_s, wv_t], axis=0)
    bq = jnp.concatenate([bq_s, bq_t], axis=0)                      # (G, d)
    bk = jnp.concatenate([bk_s, bk_t], axis=0)
    bv = jnp.concatenate([bv_s, bv_t], axis=0)

    wo = jnp.concatenate([per_head_out(params["s_out_w"]),
                          per_head_out(params["t_out_w"])], axis=0)  # (G, d, H)
    bo = jnp.stack([params["s_out_b"], params["t_out_b"]], axis=0)   # (2, H)

    return [wq, wk, wv, bq, bk, bv, wo, bo,
            params["w1"].T, params["b1"][None, :],                   # (H, FF), (1, FF)
            params["w2"].T, params["b2"][None, :],                   # (FF, H), (1, H)
            params["ln_g"][None, :], params["ln_b"][None, :]]        # (1, H), (1, H)


# ---------------------------------------------------------------------------
# Wrapper
# ---------------------------------------------------------------------------
def attention_layer_forward(inputs_tbh, params, num_heads):
    """inputs_tbh: (T, B, H) float32 -> (T, B, H) float32."""
    T, B, H = inputs_tbh.shape
    x_bth = jnp.transpose(inputs_tbh, (1, 0, 2))        # (B, T, H): grid iterates over B
    plist = _prepare_kernel_params(params, H, num_heads)

    def const_spec(a):
        nd = a.ndim
        return pl.BlockSpec(a.shape, lambda b, _nd=nd: (0,) * _nd)   # weights stay resident

    out_bth = pl.pallas_call(
        functools.partial(attention_layer_kernel, num_heads),
        out_shape=jax.ShapeDtypeStruct((B, T, H), inputs_tbh.dtype),
        grid=(B,),
        in_specs=[pl.BlockSpec((1, T, H), lambda b: (b, 0, 0))]
                 + [const_spec(p) for p in plist],
        out_specs=pl.BlockSpec((1, T, H), lambda b: (b, 0, 0)),
        compiler_params=pltpu.CompilerParams(
            dimension_semantics=("parallel",),            # megacore sharding on v7x
            vmem_limit_bytes=32 * 1024 * 1024),           # explicit, safe on v5e/v6e/v7x
    )(x_bth, *plist)

    return jnp.transpose(out_bth, (1, 0, 2))


# ---------------------------------------------------------------------------
# Pure-JAX reference (mirrors the PyTorch module, uses the ORIGINAL params).
# ---------------------------------------------------------------------------
def _layer_norm_ref(x, gamma, beta, eps=1e-5):
    mean = jnp.mean(x, axis=-1, keepdims=True)
    var = jnp.mean((x - mean) ** 2, axis=-1, keepdims=True)
    return (x - mean) * jax.lax.rsqrt(var + eps) * gamma + beta


def _mha_self_attention_ref(x, in_w, in_b, out_w, out_b, num_heads):
    T, E = x.shape
    d = E // num_heads
    qkv = jnp.dot(x, in_w.T) + in_b
    q = qkv[:, :E] * (1.0 / (d ** 0.5))
    k = qkv[:, E:2 * E]
    v = qkv[:, 2 * E:]
    qh = q.reshape(T, num_heads, d).transpose(1, 0, 2)
    kh = k.reshape(T, num_heads, d).transpose(1, 0, 2)
    vh = v.reshape(T, num_heads, d).transpose(1, 0, 2)
    scores = jnp.einsum("htd,hsd->hts", qh, kh)
    scores = scores - jnp.max(scores, axis=-1, keepdims=True)
    p = jnp.exp(scores)
    p = p / jnp.sum(p, axis=-1, keepdims=True)
    ctx = jnp.einsum("hts,hsd->htd", p, vh)
    ctx = ctx.transpose(1, 0, 2).reshape(T, E)
    return jnp.dot(ctx, out_w.T) + out_b


def reference_forward(inputs_tbh, params, num_heads):
    def per_seq(x):  # x: (T, H)
        gamma, beta = params["ln_g"], params["ln_b"]
        sp = _mha_self_attention_ref(x, params["s_in_w"], params["s_in_b"],
                                     params["s_out_w"], params["s_out_b"], num_heads)
        sp = _layer_norm_ref(sp + x, gamma, beta)
        tp = _mha_self_attention_ref(x, params["t_in_w"], params["t_in_b"],
                                     params["t_out_w"], params["t_out_b"], num_heads)
        tp = _layer_norm_ref(tp + x, gamma, beta)
        att = sp + tp
        h = jnp.dot(att, params["w1"].T) + params["b1"]
        h = jnp.dot(h, params["w2"].T) + params["b2"]
        return _layer_norm_ref(h + att, gamma, beta)

    return jax.vmap(per_seq, in_axes=1, out_axes=1)(inputs_tbh)


# ---------------------------------------------------------------------------
# Main
# ---------------------------------------------------------------------------
if __name__ == "__main__":
    T, B, H = 8, 2, 32            # (seq, batch, embed)
    NUM_HEADS = 4
    FF = 64                       # feedforward_size

    key = jax.random.PRNGKey(0)
    keys = jax.random.split(key, 16)

    def rand(k, shape, scale=0.1):
        return (scale * jax.random.normal(k, shape)).astype(jnp.float32)

    params = {
        # spatial MultiheadAttention
        "s_in_w": rand(keys[0], (3 * H, H)),
        "s_in_b": rand(keys[1], (3 * H,)),
        "s_out_w": rand(keys[2], (H, H)),
        "s_out_b": rand(keys[3], (H,)),
        # temporal MultiheadAttention
        "t_in_w": rand(keys[4], (3 * H, H)),
        "t_in_b": rand(keys[5], (3 * H,)),
        "t_out_w": rand(keys[6], (H, H)),
        "t_out_b": rand(keys[7], (H,)),
        # feedforward
        "w1": rand(keys[8], (FF, H)),
        "b1": rand(keys[9], (FF,)),
        "w2": rand(keys[10], (H, FF)),
        "b2": rand(keys[11], (H,)),
        # shared LayerNorm (PyTorch default init is ones/zeros; perturb slightly)
        "ln_g": (1.0 + 0.1 * jax.random.normal(keys[12], (H,))).astype(jnp.float32),
        "ln_b": rand(keys[13], (H,)),
    }

    inputs = jax.random.normal(keys[14], (T, B, H), dtype=jnp.float32)

    out = attention_layer_forward(inputs, params, NUM_HEADS)
    out = jax.block_until_ready(out)

    ref = jax.block_until_ready(reference_forward(inputs, params, NUM_HEADS))
    assert out.shape == (T, B, H)
    assert jnp.allclose(out, ref, atol=1e-4, rtol=1e-4), "Pallas kernel mismatch vs reference"

    print("KERNEL_OK")
</pallas_src>

<mosaic_0001>
module attributes {stable_mosaic.version = 11 : i64} {
  func.func @attention_layer_kernel(%arg0: i32, %arg1: memref<1x8x32xf32, #tpu.memory_space<vmem>>, %arg2: memref<8x32x8xf32, #tpu.memory_space<vmem>>, %arg3: memref<8x32x8xf32, #tpu.memory_space<vmem>>, %arg4: memref<8x32x8xf32, #tpu.memory_space<vmem>>, %arg5: memref<8x8xf32, #tpu.memory_space<vmem>>, %arg6: memref<8x8xf32, #tpu.memory_space<vmem>>, %arg7: memref<8x8xf32, #tpu.memory_space<vmem>>, %arg8: memref<8x8x32xf32, #tpu.memory_space<vmem>>, %arg9: memref<2x32xf32, #tpu.memory_space<vmem>>, %arg10: memref<32x64xf32, #tpu.memory_space<vmem>>, %arg11: memref<1x64xf32, #tpu.memory_space<vmem>>, %arg12: memref<64x32xf32, #tpu.memory_space<vmem>>, %arg13: memref<1x32xf32, #tpu.memory_space<vmem>>, %arg14: memref<1x32xf32, #tpu.memory_space<vmem>>, %arg15: memref<1x32xf32, #tpu.memory_space<vmem>>, %arg16: memref<1x8x32xf32, #tpu.memory_space<vmem>>) attributes {dimension_semantics = [#tpu.dimension_semantics<parallel>], iteration_bounds = array<i64: 2>, scalar_prefetch = 0 : i64, scratch_operands = 0 : i64, tpu.core_type = #tpu.core_type<tc>, window_params = [{transform_indices = @transform_0, window_bounds = array<i64: 1, 8, 32>}, {pipeline_mode = #tpu.pipeline_mode<synchronous>, transform_indices = @transform_1, window_bounds = array<i64: 8, 32, 8>}, {pipeline_mode = #tpu.pipeline_mode<synchronous>, transform_indices = @transform_2, window_bounds = array<i64: 8, 32, 8>}, {pipeline_mode = #tpu.pipeline_mode<synchronous>, transform_indices = @transform_3, window_bounds = array<i64: 8, 32, 8>}, {pipeline_mode = #tpu.pipeline_mode<synchronous>, transform_indices = @transform_4, window_bounds = array<i64: 8, 8>}, {pipeline_mode = #tpu.pipeline_mode<synchronous>, transform_indices = @transform_5, window_bounds = array<i64: 8, 8>}, {pipeline_mode = #tpu.pipeline_mode<synchronous>, transform_indices = @transform_6, window_bounds = array<i64: 8, 8>}, {pipeline_mode = #tpu.pipeline_mode<synchronous>, transform_indices = @transform_7, window_bounds = array<i64: 8, 8, 32>}, {pipeline_mode = #tpu.pipeline_mode<synchronous>, transform_indices = @transform_8, window_bounds = array<i64: 2, 32>}, {pipeline_mode = #tpu.pipeline_mode<synchronous>, transform_indices = @transform_9, window_bounds = array<i64: 32, 64>}, {pipeline_mode = #tpu.pipeline_mode<synchronous>, transform_indices = @transform_10, window_bounds = array<i64: 1, 64>}, {pipeline_mode = #tpu.pipeline_mode<synchronous>, transform_indices = @transform_11, window_bounds = array<i64: 64, 32>}, {pipeline_mode = #tpu.pipeline_mode<synchronous>, transform_indices = @transform_12, window_bounds = array<i64: 1, 32>}, {pipeline_mode = #tpu.pipeline_mode<synchronous>, transform_indices = @transform_13, window_bounds = array<i64: 1, 32>}, {pipeline_mode = #tpu.pipeline_mode<synchronous>, transform_indices = @transform_14, window_bounds = array<i64: 1, 32>}, {transform_indices = @transform_15, window_bounds = array<i64: 1, 8, 32>}]} {
    %c0 = arith.constant 0 : index
    %c0_0 = arith.constant 0 : index
    %0 = vector.load %arg14[%c0, %c0_0] : memref<1x32xf32, #tpu.memory_space<vmem>>, vector<1x32xf32>
    %c0_1 = arith.constant 0 : index
    %c0_2 = arith.constant 0 : index
    %1 = vector.load %arg15[%c0_1, %c0_2] : memref<1x32xf32, #tpu.memory_space<vmem>>, vector<1x32xf32>
    %c0_3 = arith.constant 0 : index
    %c0_4 = arith.constant 0 : index
    %c0_5 = arith.constant 0 : index
    %2 = vector.load %arg1[%c0_3, %c0_4, %c0_5] : memref<1x8x32xf32, #tpu.memory_space<vmem>>, vector<1x8x32xf32>
    %3 = vector.shape_cast %2 : vector<1x8x32xf32> to vector<8x32xf32>
    %4 = vector.shape_cast %3 : vector<8x32xf32> to vector<1x8x32xf32>
    %5 = vector.shape_cast %4 : vector<1x8x32xf32> to vector<1x8x32xf32>
    %6 = vector.broadcast %5 : vector<1x8x32xf32> to vector<8x8x32xf32>
    %c0_6 = arith.constant 0 : index
    %c0_7 = arith.constant 0 : index
    %c0_8 = arith.constant 0 : index
    %7 = vector.load %arg2[%c0_6, %c0_7, %c0_8] : memref<8x32x8xf32, #tpu.memory_space<vmem>>, vector<8x32x8xf32>
    "tpu.trace_start"() <{level = 10 : i32, message = "gth,ghd->gtd"}> : () -> ()
    %cst = arith.constant dense<0.000000e+00> : vector<8x8x8xf32>
    %8 = tpu.matmul %6, %7, %cst {dimension_numbers = #tpu.dot_dimension_numbers<[2], [1], [1], [2], [0, 0, 0, 1, 1, 2], [0], [0]>} : vector<8x8x32xf32>, vector<8x32x8xf32>, vector<8x8x8xf32> -> vector<8x8x8xf32>
    "tpu.trace_stop"() : () -> ()
    %c0_9 = arith.constant 0 : index
    %c0_10 = arith.constant 0 : index
    %9 = vector.load %arg5[%c0_9, %c0_10] : memref<8x8xf32, #tpu.memory_space<vmem>>, vector<8x8xf32>
    %10 = vector.shape_cast %9 : vector<8x8xf32> to vector<8x1x8xf32>
    %11 = vector.broadcast %10 : vector<8x1x8xf32> to vector<8x8x8xf32>
    %12 = arith.addf %8, %11 : vector<8x8x8xf32>
    %c0_11 = arith.constant 0 : index
    %c0_12 = arith.constant 0 : index
    %c0_13 = arith.constant 0 : index
    %13 = vector.load %arg3[%c0_11, %c0_12, %c0_13] : memref<8x32x8xf32, #tpu.memory_space<vmem>>, vector<8x32x8xf32>
    "tpu.trace_start"() <{level = 10 : i32, message = "gth,ghd->gtd"}> : () -> ()
    %cst_14 = arith.constant dense<0.000000e+00> : vector<8x8x8xf32>
    %14 = tpu.matmul %6, %13, %cst_14 {dimension_numbers = #tpu.dot_dimension_numbers<[2], [1], [1], [2], [0, 0, 0, 1, 1, 2], [0], [0]>} : vector<8x8x32xf32>, vector<8x32x8xf32>, vector<8x8x8xf32> -> vector<8x8x8xf32>
    "tpu.trace_stop"() : () -> ()
    %c0_15 = arith.constant 0 : index
    %c0_16 = arith.constant 0 : index
    %15 = vector.load %arg6[%c0_15, %c0_16] : memref<8x8xf32, #tpu.memory_space<vmem>>, vector<8x8xf32>
    %16 = vector.shape_cast %15 : vector<8x8xf32> to vector<8x1x8xf32>
    %17 = vector.broadcast %16 : vector<8x1x8xf32> to vector<8x8x8xf32>
    %18 = arith.addf %14, %17 : vector<8x8x8xf32>
    %c0_17 = arith.constant 0 : index
    %c0_18 = arith.constant 0 : index
    %c0_19 = arith.constant 0 : index
    %19 = vector.load %arg4[%c0_17, %c0_18, %c0_19] : memref<8x32x8xf32, #tpu.memory_space<vmem>>, vector<8x32x8xf32>
    "tpu.trace_start"() <{level = 10 : i32, message = "gth,ghd->gtd"}> : () -> ()
    %cst_20 = arith.constant dense<0.000000e+00> : vector<8x8x8xf32>
    %20 = tpu.matmul %6, %19, %cst_20 {dimension_numbers = #tpu.dot_dimension_numbers<[2], [1], [1], [2], [0, 0, 0, 1, 1, 2], [0], [0]>} : vector<8x8x32xf32>, vector<8x32x8xf32>, vector<8x8x8xf32> -> vector<8x8x8xf32>
    "tpu.trace_stop"() : () -> ()
    %c0_21 = arith.constant 0 : index
    %c0_22 = arith.constant 0 : index
    %21 = vector.load %arg7[%c0_21, %c0_22] : memref<8x8xf32, #tpu.memory_space<vmem>>, vector<8x8xf32>
    %22 = vector.shape_cast %21 : vector<8x8xf32> to vector<8x1x8xf32>
    %23 = vector.broadcast %22 : vector<8x1x8xf32> to vector<8x8x8xf32>
    %24 = arith.addf %20, %23 : vector<8x8x8xf32>
    "tpu.trace_start"() <{level = 10 : i32, message = "gtd,gsd->gts"}> : () -> ()
    %cst_23 = arith.constant dense<0.000000e+00> : vector<8x8x8xf32>
    %25 = tpu.matmul %12, %18, %cst_23 {dimension_numbers = #tpu.dot_dimension_numbers<[2], [2], [1], [1], [0, 0, 0, 1, 1, 1], [0], [0]>} : vector<8x8x8xf32>, vector<8x8x8xf32>, vector<8x8x8xf32> -> vector<8x8x8xf32>
    "tpu.trace_stop"() : () -> ()
    %cst_24 = arith.constant dense<0xFF800000> : vector<8x8xf32>
    %26 = vector.multi_reduction <maximumf>, %25, %cst_24 [2] : vector<8x8x8xf32> to vector<8x8xf32>
    %27 = vector.shape_cast %26 : vector<8x8xf32> to vector<8x8x1xf32>
    %28 = vector.broadcast %27 : vector<8x8x1xf32> to vector<8x8x8xf32>
    %29 = arith.subf %25, %28 : vector<8x8x8xf32>
    %30 = math.exp %29 : vector<8x8x8xf32>
    %cst_25 = arith.constant dense<0.000000e+00> : vector<8x8xf32>
    %31 = vector.multi_reduction <add>, %30, %cst_25 [2] : vector<8x8x8xf32> to vector<8x8xf32>
    %32 = vector.shape_cast %31 : vector<8x8xf32> to vector<8x8x1xf32>
    %cst_26 = arith.constant 1.000000e+00 : f32
    %33 = vector.broadcast %cst_26 : f32 to vector<8x8x1xf32>
    %34 = arith.divf %33, %32 : vector<8x8x1xf32>
    %35 = vector.broadcast %34 : vector<8x8x1xf32> to vector<8x8x8xf32>
    %36 = arith.mulf %30, %35 : vector<8x8x8xf32>
    "tpu.trace_start"() <{level = 10 : i32, message = "gts,gsd->gtd"}> : () -> ()
    %cst_27 = arith.constant dense<0.000000e+00> : vector<8x8x8xf32>
    %37 = tpu.matmul %36, %24, %cst_27 {dimension_numbers = #tpu.dot_dimension_numbers<[2], [1], [1], [2], [0, 0, 0, 1, 1, 2], [0], [0]>} : vector<8x8x8xf32>, vector<8x8x8xf32>, vector<8x8x8xf32> -> vector<8x8x8xf32>
    "tpu.trace_stop"() : () -> ()
    %c0_28 = arith.constant 0 : index
    %c0_29 = arith.constant 0 : index
    %c0_30 = arith.constant 0 : index
    %38 = vector.load %arg8[%c0_28, %c0_29, %c0_30] : memref<8x8x32xf32, #tpu.memory_space<vmem>>, vector<8x8x32xf32>
    "tpu.trace_start"() <{level = 10 : i32, message = "gtd,gdh->gth"}> : () -> ()
    %cst_31 = arith.constant dense<0.000000e+00> : vector<8x8x32xf32>
    %39 = tpu.matmul %37, %38, %cst_31 {dimension_numbers = #tpu.dot_dimension_numbers<[2], [1], [1], [2], [0, 0, 0, 1, 1, 2], [0], [0]>} : vector<8x8x8xf32>, vector<8x8x32xf32>, vector<8x8x32xf32> -> vector<8x8x32xf32>
    "tpu.trace_stop"() : () -> ()
    %40 = vector.shape_cast %39 : vector<8x8x32xf32> to vector<2x4x8x32xf32>
    %cst_32 = arith.constant dense<0.000000e+00> : vector<2x8x32xf32>
    %41 = vector.multi_reduction <add>, %40, %cst_32 [1] : vector<2x4x8x32xf32> to vector<2x8x32xf32>
    %c0_33 = arith.constant 0 : index
    %c0_34 = arith.constant 0 : index
    %42 = vector.load %arg9[%c0_33, %c0_34] : memref<2x32xf32, #tpu.memory_space<vmem>>, vector<2x32xf32>
    %43 = vector.shape_cast %42 : vector<2x32xf32> to vector<2x1x32xf32>
    %44 = vector.broadcast %43 : vector<2x1x32xf32> to vector<2x8x32xf32>
    %45 = arith.addf %41, %44 : vector<2x8x32xf32>
    %46 = vector.shape_cast %3 : vector<8x32xf32> to vector<1x8x32xf32>
    %47 = vector.broadcast %46 : vector<1x8x32xf32> to vector<2x8x32xf32>
    %48 = arith.addf %45, %47 : vector<2x8x32xf32>
    %cst_35 = arith.constant dense<0.000000e+00> : vector<2x8xf32>
    %49 = vector.multi_reduction <add>, %48, %cst_35 [2] : vector<2x8x32xf32> to vector<2x8xf32>
    %50 = vector.shape_cast %49 : vector<2x8xf32> to vector<2x8x1xf32>
    %cst_36 = arith.constant 3.200000e+01 : f32
    %51 = vector.broadcast %cst_36 : f32 to vector<2x8x1xf32>
    %52 = arith.divf %50, %51 : vector<2x8x1xf32>
    %53 = arith.mulf %48, %48 : vector<2x8x32xf32>
    %cst_37 = arith.constant dense<0.000000e+00> : vector<2x8xf32>
    %54 = vector.multi_reduction <add>, %53, %cst_37 [2] : vector<2x8x32xf32> to vector<2x8xf32>
    %55 = vector.shape_cast %54 : vector<2x8xf32> to vector<2x8x1xf32>
    %cst_38 = arith.constant 3.200000e+01 : f32
    %56 = vector.broadcast %cst_38 : f32 to vector<2x8x1xf32>
    %57 = arith.divf %55, %56 : vector<2x8x1xf32>
    %58 = arith.mulf %52, %52 : vector<2x8x1xf32>
    %59 = arith.subf %57, %58 : vector<2x8x1xf32>
    %60 = vector.broadcast %52 : vector<2x8x1xf32> to vector<2x8x32xf32>
    %61 = arith.subf %48, %60 : vector<2x8x32xf32>
    %cst_39 = arith.constant 9.99999974E-6 : f32
    %62 = vector.broadcast %cst_39 : f32 to vector<2x8x1xf32>
    %63 = arith.addf %59, %62 : vector<2x8x1xf32>
    %64 = math.rsqrt %63 : vector<2x8x1xf32>
    %65 = vector.broadcast %64 : vector<2x8x1xf32> to vector<2x8x32xf32>
    %66 = arith.mulf %61, %65 : vector<2x8x32xf32>
    %67 = vector.shape_cast %0 : vector<1x32xf32> to vector<1x1x32xf32>
    %68 = vector.broadcast %67 : vector<1x1x32xf32> to vector<2x8x32xf32>
    %69 = arith.mulf %66, %68 : vector<2x8x32xf32>
    %70 = vector.shape_cast %1 : vector<1x32xf32> to vector<1x1x32xf32>
    %71 = vector.broadcast %70 : vector<1x1x32xf32> to vector<2x8x32xf32>
    %72 = arith.addf %69, %71 : vector<2x8x32xf32>
    %73 = vector.extract_strided_slice %72 {offsets = [0, 0, 0], sizes = [1, 8, 32], strides = [1, 1, 1]} : vector<2x8x32xf32> to vector<1x8x32xf32>
    %74 = vector.shape_cast %73 : vector<1x8x32xf32> to vector<8x32xf32>
    %75 = vector.extract_strided_slice %72 {offsets = [1, 0, 0], sizes = [1, 8, 32], strides = [1, 1, 1]} : vector<2x8x32xf32> to vector<1x8x32xf32>
    %76 = vector.shape_cast %75 : vector<1x8x32xf32> to vector<8x32xf32>
    %77 = arith.addf %74, %76 : vector<8x32xf32>
    %c0_40 = arith.constant 0 : index
    %c0_41 = arith.constant 0 : index
    %78 = vector.load %arg10[%c0_40, %c0_41] : memref<32x64xf32, #tpu.memory_space<vmem>>, vector<32x64xf32>
    %cst_42 = arith.constant dense<0.000000e+00> : vector<8x64xf32>
    %79 = tpu.matmul %77, %78, %cst_42 {dimension_numbers = #tpu.dot_dimension_numbers<[1], [0], [0], [1], [0, 0, 1, 1], [], []>} : vector<8x32xf32>, vector<32x64xf32>, vector<8x64xf32> -> vector<8x64xf32>
    %c0_43 = arith.constant 0 : index
    %c0_44 = arith.constant 0 : index
    %80 = vector.load %arg11[%c0_43, %c0_44] : memref<1x64xf32, #tpu.memory_space<vmem>>, vector<1x64xf32>
    %81 = vector.broadcast %80 : vector<1x64xf32> to vector<8x64xf32>
    %82 = arith.addf %79, %81 : vector<8x64xf32>
    %c0_45 = arith.constant 0 : index
    %c0_46 = arith.constant 0 : index
    %83 = vector.load %arg12[%c0_45, %c0_46] : memref<64x32xf32, #tpu.memory_space<vmem>>, vector<64x32xf32>
    %cst_47 = arith.constant dense<0.000000e+00> : vector<8x32xf32>
    %84 = tpu.matmul %82, %83, %cst_47 {dimension_numbers = #tpu.dot_dimension_numbers<[1], [0], [0], [1], [0, 0, 1, 1], [], []>} : vector<8x64xf32>, vector<64x32xf32>, vector<8x32xf32> -> vector<8x32xf32>
    %c0_48 = arith.constant 0 : index
    %c0_49 = arith.constant 0 : index
    %85 = vector.load %arg13[%c0_48, %c0_49] : memref<1x32xf32, #tpu.memory_space<vmem>>, vector<1x32xf32>
    %86 = vector.broadcast %85 : vector<1x32xf32> to vector<8x32xf32>
    %87 = arith.addf %84, %86 : vector<8x32xf32>
    %88 = arith.addf %87, %77 : vector<8x32xf32>
    %cst_50 = arith.constant dense<0.000000e+00> : vector<8xf32>
    %89 = vector.multi_reduction <add>, %88, %cst_50 [1] : vector<8x32xf32> to vector<8xf32>
    %90 = vector.shape_cast %89 : vector<8xf32> to vector<8x1xf32>
    %cst_51 = arith.constant 3.200000e+01 : f32
    %91 = vector.broadcast %cst_51 : f32 to vector<8x1xf32>
    %92 = arith.divf %90, %91 : vector<8x1xf32>
    %93 = arith.mulf %88, %88 : vector<8x32xf32>
    %cst_52 = arith.constant dense<0.000000e+00> : vector<8xf32>
    %94 = vector.multi_reduction <add>, %93, %cst_52 [1] : vector<8x32xf32> to vector<8xf32>
    %95 = vector.shape_cast %94 : vector<8xf32> to vector<8x1xf32>
    %cst_53 = arith.constant 3.200000e+01 : f32
    %96 = vector.broadcast %cst_53 : f32 to vector<8x1xf32>
    %97 = arith.divf %95, %96 : vector<8x1xf32>
    %98 = arith.mulf %92, %92 : vector<8x1xf32>
    %99 = arith.subf %97, %98 : vector<8x1xf32>
    %100 = vector.broadcast %92 : vector<8x1xf32> to vector<8x32xf32>
    %101 = arith.subf %88, %100 : vector<8x32xf32>
    %cst_54 = arith.constant 9.99999974E-6 : f32
    %102 = vector.broadcast %cst_54 : f32 to vector<8x1xf32>
    %103 = arith.addf %99, %102 : vector<8x1xf32>
    %104 = math.rsqrt %103 : vector<8x1xf32>
    %105 = vector.broadcast %104 : vector<8x1xf32> to vector<8x32xf32>
    %106 = arith.mulf %101, %105 : vector<8x32xf32>
    %107 = vector.broadcast %0 : vector<1x32xf32> to vector<8x32xf32>
    %108 = arith.mulf %106, %107 : vector<8x32xf32>
    %109 = vector.broadcast %1 : vector<1x32xf32> to vector<8x32xf32>
    %110 = arith.addf %108, %109 : vector<8x32xf32>
    %c0_55 = arith.constant 0 : index
    %c0_56 = arith.constant 0 : index
    %c0_57 = arith.constant 0 : index
    %111 = vector.load %arg16[%c0_55, %c0_56, %c0_57] : memref<1x8x32xf32, #tpu.memory_space<vmem>>, vector<1x8x32xf32>
    %112 = vector.shape_cast %111 : vector<1x8x32xf32> to vector<8x32xf32>
    %113 = vector.shape_cast %110 : vector<8x32xf32> to vector<1x8x32xf32>
    tpu.vector_store %arg16[%c0_55, %c0_56, %c0_57], %113 {strides = array<i32>} : memref<1x8x32xf32, #tpu.memory_space<vmem>>, vector<1x8x32xf32>,
    return
  }
  func.func @transform_0(%arg0: i32) -> (i32, i32, i32) {
    %c0_i32 = arith.constant 0 : i32
    %c0_i32_0 = arith.constant 0 : i32
    %c0_i32_1 = arith.constant 0 : i32
    return %arg0, %c0_i32, %c0_i32_0 : i32, i32, i32
  }
  func.func @transform_1(%arg0: i32) -> (i32, i32, i32) {
    %c0_i32 = arith.constant 0 : i32
    %c0_i32_0 = arith.constant 0 : i32
    %c0_i32_1 = arith.constant 0 : i32
    %c0_i32_2 = arith.constant 0 : i32
    return %c0_i32, %c0_i32_0, %c0_i32_1 : i32, i32, i32
  }
  func.func @transform_2(%arg0: i32) -> (i32, i32, i32) {
    %c0_i32 = arith.constant 0 : i32
    %c0_i32_0 = arith.constant 0 : i32
    %c0_i32_1 = arith.constant 0 : i32
    %c0_i32_2 = arith.constant 0 : i32
    return %c0_i32, %c0_i32_0, %c0_i32_1 : i32, i32, i32
  }
  func.func @transform_3(%arg0: i32) -> (i32, i32, i32) {
    %c0_i32 = arith.constant 0 : i32
    %c0_i32_0 = arith.constant 0 : i32
    %c0_i32_1 = arith.constant 0 : i32
    %c0_i32_2 = arith.constant 0 : i32
    return %c0_i32, %c0_i32_0, %c0_i32_1 : i32, i32, i32
  }
  func.func @transform_4(%arg0: i32) -> (i32, i32) {
    %c0_i32 = arith.constant 0 : i32
    %c0_i32_0 = arith.constant 0 : i32
    %c0_i32_1 = arith.constant 0 : i32
    return %c0_i32, %c0_i32_0 : i32, i32
  }
  func.func @transform_5(%arg0: i32) -> (i32, i32) {
    %c0_i32 = arith.constant 0 : i32
    %c0_i32_0 = arith.constant 0 : i32
    %c0_i32_1 = arith.constant 0 : i32
    return %c0_i32, %c0_i32_0 : i32, i32
  }
  func.func @transform_6(%arg0: i32) -> (i32, i32) {
    %c0_i32 = arith.constant 0 : i32
    %c0_i32_0 = arith.constant 0 : i32
    %c0_i32_1 = arith.constant 0 : i32
    return %c0_i32, %c0_i32_0 : i32, i32
  }
  func.func @transform_7(%arg0: i32) -> (i32, i32, i32) {
    %c0_i32 = arith.constant 0 : i32
    %c0_i32_0 = arith.constant 0 : i32
    %c0_i32_1 = arith.constant 0 : i32
    %c0_i32_2 = arith.constant 0 : i32
    return %c0_i32, %c0_i32_0, %c0_i32_1 : i32, i32, i32
  }
  func.func @transform_8(%arg0: i32) -> (i32, i32) {
    %c0_i32 = arith.constant 0 : i32
    %c0_i32_0 = arith.constant 0 : i32
    %c0_i32_1 = arith.constant 0 : i32
    return %c0_i32, %c0_i32_0 : i32, i32
  }
  func.func @transform_9(%arg0: i32) -> (i32, i32) {
    %c0_i32 = arith.constant 0 : i32
    %c0_i32_0 = arith.constant 0 : i32
    %c0_i32_1 = arith.constant 0 : i32
    return %c0_i32, %c0_i32_0 : i32, i32
  }
  func.func @transform_10(%arg0: i32) -> (i32, i32) {
    %c0_i32 = arith.constant 0 : i32
    %c0_i32_0 = arith.constant 0 : i32
    %c0_i32_1 = arith.constant 0 : i32
    return %c0_i32, %c0_i32_0 : i32, i32
  }
  func.func @transform_11(%arg0: i32) -> (i32, i32) {
    %c0_i32 = arith.constant 0 : i32
    %c0_i32_0 = arith.constant 0 : i32
    %c0_i32_1 = arith.constant 0 : i32
    return %c0_i32, %c0_i32_0 : i32, i32
  }
  func.func @transform_12(%arg0: i32) -> (i32, i32) {
    %c0_i32 = arith.constant 0 : i32
    %c0_i32_0 = arith.constant 0 : i32
    %c0_i32_1 = arith.constant 0 : i32
    return %c0_i32, %c0_i32_0 : i32, i32
  }
  func.func @transform_13(%arg0: i32) -> (i32, i32) {
    %c0_i32 = arith.constant 0 : i32
    %c0_i32_0 = arith.constant 0 : i32
    %c0_i32_1 = arith.constant 0 : i32
    return %c0_i32, %c0_i32_0 : i32, i32
  }
  func.func @transform_14(%arg0: i32) -> (i32, i32) {
    %c0_i32 = arith.constant 0 : i32
    %c0_i32_0 = arith.constant 0 : i32
    %c0_i32_1 = arith.constant 0 : i32
    return %c0_i32, %c0_i32_0 : i32, i32
  }
  func.func @transform_15(%arg0: i32) -> (i32, i32, i32) {
    %c0_i32 = arith.constant 0 : i32
    %c0_i32_0 = arith.constant 0 : i32
    %c0_i32_1 = arith.constant 0 : i32
    return %arg0, %c0_i32, %c0_i32_0 : i32, i32, i32
  }
}

</mosaic_0001>

<llo_original>
// kernel: tpu_custom_call.1
$region0: #{tpu_custom_call.1}
  #allocation0 [shape = 'u32[]', space=smem, size = 0x4, offset = 0x4, fixed_abs, tag = 'smem constant byte address 0x4 - core index']
  #allocation1 [shape = 'u32[72,128]{1,0:T(1,128)}', space=vmem, size = 0x9000, scoped, tag = 'internal scratch']
  %s0 = inlined_call_operand.vmem [shape: f32[2,8,32], index: 0, kind: input, shape index: {}]
  %s1 = inlined_call_operand.vmem [shape: f32[8,32,8], index: 1, kind: input, shape index: {}]
  %s2 = inlined_call_operand.vmem [shape: f32[8,32,8], index: 2, kind: input, shape index: {}]
  %s3 = inlined_call_operand.vmem [shape: f32[8,32,8], index: 3, kind: input, shape index: {}]
  %s4 = inlined_call_operand.vmem [shape: f32[8,8], index: 4, kind: input, shape index: {}]
  %s5 = inlined_call_operand.vmem [shape: f32[8,8], index: 5, kind: input, shape index: {}]
  %s6 = inlined_call_operand.vmem [shape: f32[8,8], index: 6, kind: input, shape index: {}]
  %s7 = inlined_call_operand.vmem [shape: f32[8,8,32], index: 7, kind: input, shape index: {}]
  %s8 = inlined_call_operand.vmem [shape: f32[2,32], index: 8, kind: input, shape index: {}]
  %s9 = inlined_call_operand.vmem [shape: f32[32,64], index: 9, kind: input, shape index: {}]
  %s10 = inlined_call_operand.vmem [shape: f32[1,64], index: 10, kind: input, shape index: {}]
  %s11 = inlined_call_operand.vmem [shape: f32[64,32], index: 11, kind: input, shape index: {}]
  %s12 = inlined_call_operand.vmem [shape: f32[1,32], index: 12, kind: input, shape index: {}]
  %s13 = inlined_call_operand.vmem [shape: f32[1,32], index: 13, kind: input, shape index: {}]
  %s14 = inlined_call_operand.vmem [shape: f32[1,32], index: 14, kind: input, shape index: {}]
  %s15 = inlined_call_operand.hbm [shape: f32[2,8,32], index: 15, kind: output, shape index: {}]
  %s16 = sld [smem:[#allocation0]]
  $region93: #{tpu_custom_call.1} parent=0
    _
  %s18 = ssub.s32 1, %s16
  %s19 = scalar_select 0, %s18, %s16
  $region1: #{tpu_custom_call.1} parent=0
    #allocation2 [shape = 'u8[8192]{0}', space=vmem, size = 0x2000, scoped, tag = 'output window, operand 0']
    #allocation3 [shape = 's32[2]{0}', space=sflag, size = 0x8, scoped, tag = 'scoped memory for tpu_custom_call.1']
    %20 = vsyncpa [#allocation3], 0
    %s21 = scalar_lea.sflag [#allocation3], 1
    %22 = vsyncpa %s21, 0
    loop: start=0, step=1, limit=4
    $region2: #{tpu_custom_call.1} parent=1 // loop_pre_header
      _
    $region3: #{tpu_custom_call.1} parent=1 // loop_header
      %s24 = sphi 0, %s28
      %p25 = scmp.ge.s32.totalorder %s24, 4
      %s34 = sphi 0, %s36
      %s37 = sphi 0, %s34
      %s38 = sphi 0, %s37
      %s54 = sphi 0, %s38
      %s58 = sphi 0, %s58
      %s60 = sphi 0, %s58
      %s61 = sphi 0, %s60
      %s75 = sphi 0, %s61
      %s79 = sphi 0, %s79
      %s81 = sphi 0, %s79
      %s82 = sphi 0, %s81
      %s96 = sphi 0, %s82
      %s100 = sphi 0, %s100
      %s102 = sphi 0, %s100
      %s103 = sphi 0, %s102
      %s117 = sphi 0, %s103
      %s121 = sphi 0, %s121
      %s123 = sphi 0, %s121
      %s124 = sphi 0, %s123
      %s138 = sphi 0, %s124
      %s142 = sphi 0, %s142
      %s144 = sphi 0, %s142
      %s145 = sphi 0, %s144
      %s159 = sphi 0, %s145
      %s163 = sphi 0, %s163
      %s165 = sphi 0, %s163
      %s166 = sphi 0, %s165
      %s180 = sphi 0, %s166
      %s184 = sphi 0, %s184
      %s186 = sphi 0, %s184
      %s187 = sphi 0, %s186
      %s201 = sphi 0, %s187
      %s205 = sphi 0, %s205
      %s207 = sphi 0, %s205
      %s208 = sphi 0, %s207
      %s222 = sphi 0, %s208
      %s226 = sphi 0, %s226
      %s228 = sphi 0, %s226
      %s229 = sphi 0, %s228
      %s243 = sphi 0, %s229
      %s247 = sphi 0, %s247
      %s249 = sphi 0, %s247
      %s250 = sphi 0, %s249
      %s264 = sphi 0, %s250
      %s268 = sphi 0, %s268
      %s270 = sphi 0, %s268
      %s271 = sphi 0, %s270
      %s285 = sphi 0, %s271
      %s289 = sphi 0, %s289
      %s291 = sphi 0, %s289
      %s292 = sphi 0, %s291
      %s306 = sphi 0, %s292
      %s310 = sphi 0, %s310
      %s312 = sphi 0, %s310
      %s313 = sphi 0, %s312
      %s327 = sphi 0, %s313
      %s331 = sphi 0, %s331
      %s333 = sphi 0, %s331
      %s334 = sphi 0, %s333
      %s348 = sphi 0, %s334
      %s354 = sphi 0, %s356
      %s357 = sphi 0, %s354
      %s358 = sphi 0, %s357
      %s374 = sphi 0, %s358
    $region4: #{tpu_custom_call.1} parent=1 // loop_header_branch
      %27 = sbr.rel (%p25) target = $region8
    $region5: #{tpu_custom_call.1} parent=1 // loop_body
      %s29 = ssub.s32 %s24, 1
      %s30 = ssub.s32 %s24, 2
      %s31 = sadd.s32 %s24, 1
      %s32 = ssub.s32 %s24, %s31
      %p33 = scmp.eq.s32.totalorder %s32, 0
      %s35 = sadd.s32 %s34, 1
      %s36 = scalar_select %p33, %s34, %s35
      %p39 = pneg %p33
      %p40 = scmp.eq.s32.totalorder %s24, 1
      %p41 = por %p39, %p40
      %p42 = scmp.ne.s32.totalorder %s34, %s37
      %p43 = scmp.eq.s32.totalorder %s24, 0
      %p44 = por %p42, %p43
      %p45 = scmp.ne.s32.totalorder %s34, %s37
      %p46 = scmp.eq.s32.totalorder %s29, 1
      %p47 = por %p45, %p46
      %p48 = scmp.ne.s32.totalorder %s37, %s38
      %p49 = scmp.eq.s32.totalorder %s29, 0
      %p50 = por %p48, %p49
      %p51 = scmp.ne.s32.totalorder %s37, %s38
      %p52 = scmp.eq.s32.totalorder %s30, 1
      %p53 = por %p51, %p52
      %p55 = scmp.ne.s32.totalorder %s38, %s54
      %p56 = scmp.eq.s32.totalorder %s30, 0
      %p57 = por %p55, %p56
      %s59 = sadd.s32 %s58, 1
      %p62 = scmp.eq.s32.totalorder %s24, 1
      %p63 = scmp.ne.s32.totalorder %s58, %s60
      %p64 = scmp.eq.s32.totalorder %s24, 0
      %p65 = por %p63, %p64
      %p66 = scmp.ne.s32.totalorder %s58, %s60
      %p67 = scmp.eq.s32.totalorder %s29, 1
      %p68 = por %p66, %p67
      %p69 = scmp.ne.s32.totalorder %s60, %s61
      %p70 = scmp.eq.s32.totalorder %s29, 0
      %p71 = por %p69, %p70
      %p72 = scmp.ne.s32.totalorder %s60, %s61
      %p73 = scmp.eq.s32.totalorder %s30, 1
      %p74 = por %p72, %p73
      %p76 = scmp.ne.s32.totalorder %s61, %s75
      %p77 = scmp.eq.s32.totalorder %s30, 0
      %p78 = por %p76, %p77
      %s80 = sadd.s32 %s79, 1
      %p83 = scmp.eq.s32.totalorder %s24, 1
      %p84 = scmp.ne.s32.totalorder %s79, %s81
      %p85 = scmp.eq.s32.totalorder %s24, 0
      %p86 = por %p84, %p85
      %p87 = scmp.ne.s32.totalorder %s79, %s81
      %p88 = scmp.eq.s32.totalorder %s29, 1
      %p89 = por %p87, %p88
      %p90 = scmp.ne.s32.totalorder %s81, %s82
      %p91 = scmp.eq.s32.totalorder %s29, 0
      %p92 = por %p90, %p91
      %p93 = scmp.ne.s32.totalorder %s81, %s82
      %p94 = scmp.eq.s32.totalorder %s30, 1
      %p95 = por %p93, %p94
      %p97 = scmp.ne.s32.totalorder %s82, %s96
      %p98 = scmp.eq.s32.totalorder %s30, 0
      %p99 = por %p97, %p98
      %s101 = sadd.s32 %s100, 1
      %p104 = scmp.eq.s32.totalorder %s24, 1
      %p105 = scmp.ne.s32.totalorder %s100, %s102
      %p106 = scmp.eq.s32.totalorder %s24, 0
      %p107 = por %p105, %p106
      %p108 = scmp.ne.s32.totalorder %s100, %s102
      %p109 = scmp.eq.s32.totalorder %s29, 1
      %p110 = por %p108, %p109
      %p111 = scmp.ne.s32.totalorder %s102, %s103
      %p112 = scmp.eq.s32.totalorder %s29, 0
      %p113 = por %p111, %p112
      %p114 = scmp.ne.s32.totalorder %s102, %s103
      %p115 = scmp.eq.s32.totalorder %s30, 1
      %p116 = por %p114, %p115
      %p118 = scmp.ne.s32.totalorder %s103, %s117
      %p119 = scmp.eq.s32.totalorder %s30, 0
      %p120 = por %p118, %p119
      %s122 = sadd.s32 %s121, 1
      %p125 = scmp.eq.s32.totalorder %s24, 1
      %p126 = scmp.ne.s32.totalorder %s121, %s123
      %p127 = scmp.eq.s32.totalorder %s24, 0
      %p128 = por %p126, %p127
      %p129 = scmp.ne.s32.totalorder %s121, %s123
      %p130 = scmp.eq.s32.totalorder %s29, 1
      %p131 = por %p129, %p130
      %p132 = scmp.ne.s32.totalorder %s123, %s124
      %p133 = scmp.eq.s32.totalorder %s29, 0
      %p134 = por %p132, %p133
      %p135 = scmp.ne.s32.totalorder %s123, %s124
      %p136 = scmp.eq.s32.totalorder %s30, 1
      %p137 = por %p135, %p136
      %p139 = scmp.ne.s32.totalorder %s124, %s138
      %p140 = scmp.eq.s32.totalorder %s30, 0
      %p141 = por %p139, %p140
      %s143 = sadd.s32 %s142, 1
      %p146 = scmp.eq.s32.totalorder %s24, 1
      %p147 = scmp.ne.s32.totalorder %s142, %s144
      %p148 = scmp.eq.s32.totalorder %s24, 0
      %p149 = por %p147, %p148
      %p150 = scmp.ne.s32.totalorder %s142, %s144
      %p151 = scmp.eq.s32.totalorder %s29, 1
      %p152 = por %p150, %p151
      %p153 = scmp.ne.s32.totalorder %s144, %s145
      %p154 = scmp.eq.s32.totalorder %s29, 0
      %p155 = por %p153, %p154
      %p156 = scmp.ne.s32.totalorder %s144, %s145
      %p157 = scmp.eq.s32.totalorder %s30, 1
      %p158 = por %p156, %p157
      %p160 = scmp.ne.s32.totalorder %s145, %s159
      %p161 = scmp.eq.s32.totalorder %s30, 0
      %p162 = por %p160, %p161
      %s164 = sadd.s32 %s163, 1
      %p167 = scmp.eq.s32.totalorder %s24, 1
      %p168 = scmp.ne.s32.totalorder %s163, %s165
      %p169 = scmp.eq.s32.totalorder %s24, 0
      %p170 = por %p168, %p169
      %p171 = scmp.ne.s32.totalorder %s163, %s165
      %p172 = scmp.eq.s32.totalorder %s29, 1
      %p173 = por %p171, %p172
      %p174 = scmp.ne.s32.totalorder %s165, %s166
      %p175 = scmp.eq.s32.totalorder %s29, 0
      %p176 = por %p174, %p175
      %p177 = scmp.ne.s32.totalorder %s165, %s166
      %p178 = scmp.eq.s32.totalorder %s30, 1
      %p179 = por %p177, %p178
      %p181 = scmp.ne.s32.totalorder %s166, %s180
      %p182 = scmp.eq.s32.totalorder %s30, 0
      %p183 = por %p181, %p182
      %s185 = sadd.s32 %s184, 1
      %p188 = scmp.eq.s32.totalorder %s24, 1
      %p189 = scmp.ne.s32.totalorder %s184, %s186
      %p190 = scmp.eq.s32.totalorder %s24, 0
      %p191 = por %p189, %p190
      %p192 = scmp.ne.s32.totalorder %s184, %s186
      %p193 = scmp.eq.s32.totalorder %s29, 1
      %p194 = por %p192, %p193
      %p195 = scmp.ne.s32.totalorder %s186, %s187
      %p196 = scmp.eq.s32.totalorder %s29, 0
      %p197 = por %p195, %p196
      %p198 = scmp.ne.s32.totalorder %s186, %s187
      %p199 = scmp.eq.s32.totalorder %s30, 1
      %p200 = por %p198, %p199
      %p202 = scmp.ne.s32.totalorder %s187, %s201
      %p203 = scmp.eq.s32.totalorder %s30, 0
      %p204 = por %p202, %p203
      %s206 = sadd.s32 %s205, 1
      %p209 = scmp.eq.s32.totalorder %s24, 1
      %p210 = scmp.ne.s32.totalorder %s205, %s207
      %p211 = scmp.eq.s32.totalorder %s24, 0
      %p212 = por %p210, %p211
      %p213 = scmp.ne.s32.totalorder %s205, %s207
      %p214 = scmp.eq.s32.totalorder %s29, 1
      %p215 = por %p213, %p214
      %p216 = scmp.ne.s32.totalorder %s207, %s208
      %p217 = scmp.eq.s32.totalorder %s29, 0
      %p218 = por %p216, %p217
      %p219 = scmp.ne.s32.totalorder %s207, %s208
      %p220 = scmp.eq.s32.totalorder %s30, 1
      %p221 = por %p219, %p220
      %p223 = scmp.ne.s32.totalorder %s208, %s222
      %p224 = scmp.eq.s32.totalorder %s30, 0
      %p225 = por %p223, %p224
      %s227 = sadd.s32 %s226, 1
      %p230 = scmp.eq.s32.totalorder %s24, 1
      %p231 = scmp.ne.s32.totalorder %s226, %s228
      %p232 = scmp.eq.s32.totalorder %s24, 0
      %p233 = por %p231, %p232
      %p234 = scmp.ne.s32.totalorder %s226, %s228
      %p235 = scmp.eq.s32.totalorder %s29, 1
      %p236 = por %p234, %p235
      %p237 = scmp.ne.s32.totalorder %s228, %s229
      %p238 = scmp.eq.s32.totalorder %s29, 0
      %p239 = por %p237, %p238
      %p240 = scmp.ne.s32.totalorder %s228, %s229
      %p241 = scmp.eq.s32.totalorder %s30, 1
      %p242 = por %p240, %p241
      %p244 = scmp.ne.s32.totalorder %s229, %s243
      %p245 = scmp.eq.s32.totalorder %s30, 0
      %p246 = por %p244, %p245
      %s248 = sadd.s32 %s247, 1
      %p251 = scmp.eq.s32.totalorder %s24, 1
      %p252 = scmp.ne.s32.totalorder %s247, %s249
      %p253 = scmp.eq.s32.totalorder %s24, 0
      %p254 = por %p252, %p253
      %p255 = scmp.ne.s32.totalorder %s247, %s249
      %p256 = scmp.eq.s32.totalorder %s29, 1
      %p257 = por %p255, %p256
      %p258 = scmp.ne.s32.totalorder %s249, %s250
      %p259 = scmp.eq.s32.totalorder %s29, 0
      %p260 = por %p258, %p259
      %p261 = scmp.ne.s32.totalorder %s249, %s250
      %p262 = scmp.eq.s32.totalorder %s30, 1
      %p263 = por %p261, %p262
      %p265 = scmp.ne.s32.totalorder %s250, %s264
      %p266 = scmp.eq.s32.totalorder %s30, 0
      %p267 = por %p265, %p266
      %s269 = sadd.s32 %s268, 1
      %p272 = scmp.eq.s32.totalorder %s24, 1
      %p273 = scmp.ne.s32.totalorder %s268, %s270
      %p274 = scmp.eq.s32.totalorder %s24, 0
      %p275 = por %p273, %p274
      %p276 = scmp.ne.s32.totalorder %s268, %s270
      %p277 = scmp.eq.s32.totalorder %s29, 1
      %p278 = por %p276, %p277
      %p279 = scmp.ne.s32.totalorder %s270, %s271
      %p280 = scmp.eq.s32.totalorder %s29, 0
      %p281 = por %p279, %p280
      %p282 = scmp.ne.s32.totalorder %s270, %s271
      %p283 = scmp.eq.s32.totalorder %s30, 1
      %p284 = por %p282, %p283
      %p286 = scmp.ne.s32.totalorder %s271, %s285
      %p287 = scmp.eq.s32.totalorder %s30, 0
      %p288 = por %p286, %p287
      %s290 = sadd.s32 %s289, 1
      %p293 = scmp.eq.s32.totalorder %s24, 1
      %p294 = scmp.ne.s32.totalorder %s289, %s291
      %p295 = scmp.eq.s32.totalorder %s24, 0
      %p296 = por %p294, %p295
      %p297 = scmp.ne.s32.totalorder %s289, %s291
      %p298 = scmp.eq.s32.totalorder %s29, 1
      %p299 = por %p297, %p298
      %p300 = scmp.ne.s32.totalorder %s291, %s292
      %p301 = scmp.eq.s32.totalorder %s29, 0
      %p302 = por %p300, %p301
      %p303 = scmp.ne.s32.totalorder %s291, %s292
      %p304 = scmp.eq.s32.totalorder %s30, 1
      %p305 = por %p303, %p304
      %p307 = scmp.ne.s32.totalorder %s292, %s306
      %p308 = scmp.eq.s32.totalorder %s30, 0
      %p309 = por %p307, %p308
      %s311 = sadd.s32 %s310, 1
      %p314 = scmp.eq.s32.totalorder %s24, 1
      %p315 = scmp.ne.s32.totalorder %s310, %s312
      %p316 = scmp.eq.s32.totalorder %s24, 0
      %p317 = por %p315, %p316
      %p318 = scmp.ne.s32.totalorder %s310, %s312
      %p319 = scmp.eq.s32.totalorder %s29, 1
      %p320 = por %p318, %p319
      %p321 = scmp.ne.s32.totalorder %s312, %s313
      %p322 = scmp.eq.s32.totalorder %s29, 0
      %p323 = por %p321, %p322
      %p324 = scmp.ne.s32.totalorder %s312, %s313
      %p325 = scmp.eq.s32.totalorder %s30, 1
      %p326 = por %p324, %p325
      %p328 = scmp.ne.s32.totalorder %s313, %s327
      %p329 = scmp.eq.s32.totalorder %s30, 0
      %p330 = por %p328, %p329
      %s332 = sadd.s32 %s331, 1
      %p335 = scmp.eq.s32.totalorder %s24, 1
      %p336 = scmp.ne.s32.totalorder %s331, %s333
      %p337 = scmp.eq.s32.totalorder %s24, 0
      %p338 = por %p336, %p337
      %p339 = scmp.ne.s32.totalorder %s331, %s333
      %p340 = scmp.eq.s32.totalorder %s29, 1
      %p341 = por %p339, %p340
      %p342 = scmp.ne.s32.totalorder %s333, %s334
      %p343 = scmp.eq.s32.totalorder %s29, 0
      %p344 = por %p342, %p343
      %p345 = scmp.ne.s32.totalorder %s333, %s334
      %p346 = scmp.eq.s32.totalorder %s30, 1
      %p347 = por %p345, %p346
      %p349 = scmp.ne.s32.totalorder %s334, %s348
      %p350 = scmp.eq.s32.totalorder %s30, 0
      %p351 = por %p349, %p350
      %s352 = ssub.s32 %s24, %s31
      %p353 = scmp.eq.s32.totalorder %s352, 0
      %s355 = sadd.s32 %s354, 1
      %s356 = scalar_select %p353, %s354, %s355
      %p359 = pneg %p353
      %p360 = scmp.eq.s32.totalorder %s24, 1
      %p361 = por %p359, %p360
      %p362 = scmp.ne.s32.totalorder %s354, %s357
      %p363 = scmp.eq.s32.totalorder %s24, 0
      %p364 = por %p362, %p363
      %p365 = scmp.ne.s32.totalorder %s354, %s357
      %p366 = scmp.eq.s32.totalorder %s29, 1
      %p367 = por %p365, %p366
      %p368 = scmp.ne.s32.totalorder %s357, %s358
      %p369 = scmp.eq.s32.totalorder %s29, 0
      %p370 = por %p368, %p369
      %p371 = scmp.ne.s32.totalorder %s357, %s358
      %p372 = scmp.eq.s32.totalorder %s30, 1
      %p373 = por %p371, %p372
      %p375 = scmp.ne.s32.totalorder %s358, %s374
      %p376 = scmp.eq.s32.totalorder %s30, 0
      %p377 = por %p375, %p376
      %p378 = scmp.le.s32.totalorder 1, %s24
      %p379 = scmp.lt.s32.totalorder %s24, 3
      %p380 = pnand %p378, %p379
      %p381 = pneg %p380
      // Predicated region
      $region9: #{tpu_custom_call.1} parent=5 // pred_check
        _
      $region10: #{tpu_custom_call.1} parent=5 // pred_check_branch
        %383 = sbr.rel (%p380) target = $region12
      $region11: #{tpu_custom_call.1} parent=5 // pred_region
        %s384 = ssub.s32 %s24, 1
        // Predicated region
        $region13: #{tpu_custom_call.1} parent=11 // pred_check
          %p385 = pneg %p71
        $region14: #{tpu_custom_call.1} parent=11 // pred_check_branch
          %387 = sbr.rel (%p385) target = $region16
        $region15: #{tpu_custom_call.1} parent=11 // pred_region
          _
        $region16: #{tpu_custom_call.1} parent=11 // pred_fallthru
          _
        // Predicated region
        $region17: #{tpu_custom_call.1} parent=11 // pred_check
          %p388 = pneg %p92
        $region18: #{tpu_custom_call.1} parent=11 // pred_check_branch
          %390 = sbr.rel (%p388) target = $region20
        $region19: #{tpu_custom_call.1} parent=11 // pred_region
          _
        $region20: #{tpu_custom_call.1} parent=11 // pred_fallthru
          _
        // Predicated region
        $region21: #{tpu_custom_call.1} parent=11 // pred_check
          %p391 = pneg %p113
        $region22: #{tpu_custom_call.1} parent=11 // pred_check_branch
          %393 = sbr.rel (%p391) target = $region24
        $region23: #{tpu_custom_call.1} parent=11 // pred_region
          _
        $region24: #{tpu_custom_call.1} parent=11 // pred_fallthru
          _
        // Predicated region
        $region25: #{tpu_custom_call.1} parent=11 // pred_check
          %p394 = pneg %p134
        $region26: #{tpu_custom_call.1} parent=11 // pred_check_branch
          %396 = sbr.rel (%p394) target = $region28
        $region27: #{tpu_custom_call.1} parent=11 // pred_region
          _
        $region28: #{tpu_custom_call.1} parent=11 // pred_fallthru
          _
        // Predicated region
        $region29: #{tpu_custom_call.1} parent=11 // pred_check
          %p397 = pneg %p155
        $region30: #{tpu_custom_call.1} parent=11 // pred_check_branch
          %399 = sbr.rel (%p397) target = $region32
        $region31: #{tpu_custom_call.1} parent=11 // pred_region
          _
        $region32: #{tpu_custom_call.1} parent=11 // pred_fallthru
          _
        // Predicated region
        $region33: #{tpu_custom_call.1} parent=11 // pred_check
          %p400 = pneg %p176
        $region34: #{tpu_custom_call.1} parent=11 // pred_check_branch
          %402 = sbr.rel (%p400) target = $region36
        $region35: #{tpu_custom_call.1} parent=11 // pred_region
          _
        $region36: #{tpu_custom_call.1} parent=11 // pred_fallthru
          _
        // Predicated region
        $region37: #{tpu_custom_call.1} parent=11 // pred_check
          %p403 = pneg %p197
        $region38: #{tpu_custom_call.1} parent=11 // pred_check_branch
          %405 = sbr.rel (%p403) target = $region40
        $region39: #{tpu_custom_call.1} parent=11 // pred_region
          _
        $region40: #{tpu_custom_call.1} parent=11 // pred_fallthru
          _
        // Predicated region
        $region41: #{tpu_custom_call.1} parent=11 // pred_check
          %p406 = pneg %p218
        $region42: #{tpu_custom_call.1} parent=11 // pred_check_branch
          %408 = sbr.rel (%p406) target = $region44
        $region43: #{tpu_custom_call.1} parent=11 // pred_region
          _
        $region44: #{tpu_custom_call.1} parent=11 // pred_fallthru
          _
        // Predicated region
        $region45: #{tpu_custom_call.1} parent=11 // pred_check
          %p409 = pneg %p239
        $region46: #{tpu_custom_call.1} parent=11 // pred_check_branch
          %411 = sbr.rel (%p409) target = $region48
        $region47: #{tpu_custom_call.1} parent=11 // pred_region
          _
        $region48: #{tpu_custom_call.1} parent=11 // pred_fallthru
          _
        // Predicated region
        $region49: #{tpu_custom_call.1} parent=11 // pred_check
          %p412 = pneg %p260
        $region50: #{tpu_custom_call.1} parent=11 // pred_check_branch
          %414 = sbr.rel (%p412) target = $region52
        $region51: #{tpu_custom_call.1} parent=11 // pred_region
          _
        $region52: #{tpu_custom_call.1} parent=11 // pred_fallthru
          _
        // Predicated region
        $region53: #{tpu_custom_call.1} parent=11 // pred_check
          %p415 = pneg %p281
        $region54: #{tpu_custom_call.1} parent=11 // pred_check_branch
          %417 = sbr.rel (%p415) target = $region56
        $region55: #{tpu_custom_call.1} parent=11 // pred_region
          _
        $region56: #{tpu_custom_call.1} parent=11 // pred_fallthru
          _
        // Predicated region
        $region57: #{tpu_custom_call.1} parent=11 // pred_check
          %p418 = pneg %p302
        $region58: #{tpu_custom_call.1} parent=11 // pred_check_branch
          %420 = sbr.rel (%p418) target = $region60
        $region59: #{tpu_custom_call.1} parent=11 // pred_region
          _
        $region60: #{tpu_custom_call.1} parent=11 // pred_fallthru
          _
        // Predicated region
        $region61: #{tpu_custom_call.1} parent=11 // pred_check
          %p421 = pneg %p323
        $region62: #{tpu_custom_call.1} parent=11 // pred_check_branch
          %423 = sbr.rel (%p421) target = $region64
        $region63: #{tpu_custom_call.1} parent=11 // pred_region
          _
        $region64: #{tpu_custom_call.1} parent=11 // pred_fallthru
          _
        // Predicated region
        $region65: #{tpu_custom_call.1} parent=11 // pred_check
          %p424 = pneg %p344
        $region66: #{tpu_custom_call.1} parent=11 // pred_check_branch
          %426 = sbr.rel (%p424) target = $region68
        $region67: #{tpu_custom_call.1} parent=11 // pred_region
          _
        $region68: #{tpu_custom_call.1} parent=11 // pred_fallthru
          _
      $region12: #{tpu_custom_call.1} parent=5 // pred_fallthru
        _
      %p427 = scmp.lt.s32.totalorder %s24, 2
      // Predicated region
      $region69: #{tpu_custom_call.1} parent=5 // pred_check
        %p428 = pneg %p427
      $region70: #{tpu_custom_call.1} parent=5 // pred_check_branch
        %430 = sbr.rel (%p428) target = $region72
      $region71: #{tpu_custom_call.1} parent=5 // pred_region
        // Predicated region
        $region73: #{tpu_custom_call.1} parent=71 // pred_check
          %p431 = pneg %p44
        $region74: #{tpu_custom_call.1} parent=71 // pred_check_branch
          %433 = sbr.rel (%p431) target = $region76
        $region75: #{tpu_custom_call.1} parent=71 // pred_region
          %p434 = scmp.lt.s32.totalorder %s24, 1
          %s435 = scalar_select %p434, %s24, 1
          %s436 = smul.addr %s435, 8
          %s437 = scalar_lea.vmem %s0, %s436
        $region76: #{tpu_custom_call.1} parent=71 // pred_fallthru
          _
      $region72: #{tpu_custom_call.1} parent=5 // pred_fallthru
        _
      %p438 = scmp.le.s32.totalorder 1, %s24
      %p439 = scmp.lt.s32.totalorder %s24, 3
      %p440 = pnand %p438, %p439
      %p441 = pneg %p440
      // Predicated region
      $region77: #{tpu_custom_call.1} parent=5 // pred_check
        _
      $region78: #{tpu_custom_call.1} parent=5 // pred_check_branch
        %443 = sbr.rel (%p440) target = $region80
      $region79: #{tpu_custom_call.1} parent=5 // pred_region
        %s444 = ssub.s32 %s24, 1
        %p445 = scmp.lt.s32.totalorder %s29, 1
        %s446 = scalar_select %p445, %s29, 1
        %s447 = smul.addr %s446, 8
        %s448 = scalar_lea.vmem %s0, %s447
        %p449 = pneg %p50
        %p450 = pneg %p47
        %p451 = pneg %p71
        %p452 = pneg %p68
        %p453 = pneg %p92
        %p454 = pneg %p89
        %p455 = pneg %p113
        %p456 = pneg %p110
        %p457 = pneg %p134
        %p458 = pneg %p131
        %p459 = pneg %p155
        %p460 = pneg %p152
        %p461 = pneg %p176
        %p462 = pneg %p173
        %p463 = pneg %p197
        %p464 = pneg %p194
        %p465 = pneg %p218
        %p466 = pneg %p215
        %p467 = pneg %p239
        %p468 = pneg %p236
        %p469 = pneg %p260
        %p470 = pneg %p257
        %p471 = pneg %p281
        %p472 = pneg %p278
        %p473 = pneg %p302
        %p474 = pneg %p299
        %p475 = pneg %p323
        %p476 = pneg %p320
        %p477 = pneg %p344
        %p478 = pneg %p341
        %p479 = pneg %p370
        %p480 = pneg %p367
        %s481 = sand.u32 %s357, 1
        %s482 = scalar_lea.sflag [#allocation3], %s481
        %s483 = sand.u32 %s357, 1
        %s484 = smul.addr %s483, 8
        %s485 = scalar_lea.vmem [#allocation2], %s484
        %p486 = scmp.lt.s32.totalorder %s29, 1
        %s487 = scalar_select %p486, %s29, 1
        %s488 = smul.addr %s487, 8
        %s489 = scalar_lea.vmem %s0, %s488
        %v490 = vld [vmem:[%s13] sm:$0x1]
        %v491 = vld [vmem:[%s14] sm:$0x1]
        %v492 = vld [vmem:[%s489] sm:$0xff]
        %v493 = vld [vmem:[%s1] sm:$0xff]
        %v494 = vld [vmem:[%s1 + $0x8] sm:$0xff]
        %v495 = vld [vmem:[%s1 + $0x10] sm:$0xff]
        %v496 = vld [vmem:[%s1 + $0x18] sm:$0xff]
        %v497 = vld [vmem:[%s1 + $0x20] sm:$0xff]
        %v498 = vld [vmem:[%s1 + $0x28] sm:$0xff]
        %v499 = vld [vmem:[%s1 + $0x30] sm:$0xff]
        %v500 = vld [vmem:[%s1 + $0x38] sm:$0xff]
        %v501 = vld [vmem:[%s1 + $0x40] sm:$0xff]
        %v502 = vld [vmem:[%s1 + $0x48] sm:$0xff]
        %v503 = vld [vmem:[%s1 + $0x50] sm:$0xff]
        %v504 = vld [vmem:[%s1 + $0x58] sm:$0xff]
        %v505 = vld [vmem:[%s1 + $0x60] sm:$0xff]
        %v506 = vld [vmem:[%s1 + $0x68] sm:$0xff]
        %v507 = vld [vmem:[%s1 + $0x70] sm:$0xff]
        %v508 = vld [vmem:[%s1 + $0x78] sm:$0xff]
        %v509 = vld [vmem:[%s1 + $0x80] sm:$0xff]
        %v510 = vld [vmem:[%s1 + $0x88] sm:$0xff]
        %v511 = vld [vmem:[%s1 + $0x90] sm:$0xff]
        %v512 = vld [vmem:[%s1 + $0x98] sm:$0xff]
        %v513 = vld [vmem:[%s1 + $0xa0] sm:$0xff]
        %v514 = vld [vmem:[%s1 + $0xa8] sm:$0xff]
        %v515 = vld [vmem:[%s1 + $0xb0] sm:$0xff]
        %v516 = vld [vmem:[%s1 + $0xb8] sm:$0xff]
        %v517 = vld [vmem:[%s1 + $0xc0] sm:$0xff]
        %v518 = vld [vmem:[%s1 + $0xc8] sm:$0xff]
        %v519 = vld [vmem:[%s1 + $0xd0] sm:$0xff]
        %v520 = vld [vmem:[%s1 + $0xd8] sm:$0xff]
        %v521 = vld [vmem:[%s1 + $0xe0] sm:$0xff]
        %v522 = vld [vmem:[%s1 + $0xe8] sm:$0xff]
        %v523 = vld [vmem:[%s1 + $0xf0] sm:$0xff]
        %v524 = vld [vmem:[%s1 + $0xf8] sm:$0xff]
        %v525 = vld [vmem:[%s4] sm:$0xff]
        %v527 = vrot.slane %v525, 1
        %v528 = vrot.slane %v525, 2
        %v529 = vrot.slane %v525, 3
        %v530 = vrot.slane %v525, 4
        %v531 = vrot.slane %v525, 5
        %v532 = vrot.slane %v525, 6
        %v533 = vrot.slane %v525, 7
        %v534 = vperm.slane %v525, 0
        %v535 = vperm.slane %v527, 0
        %v536 = vperm.slane %v528, 0
        %v537 = vperm.slane %v529, 0
        %v538 = vperm.slane %v530, 0
        %v539 = vperm.slane %v531, 0
        %v540 = vperm.slane %v532, 0
        %v541 = vperm.slane %v533, 0
        %vm550 = vcmask 261120
        %v552 = vsel %vm550, %v492, 0
        %554 = vmatpush.msra.mxu0 0.0
        %555 = vmatpush.msra.mxu0 0.0
        %556 = vmatpush.msra.mxu0 0.0
        %557 = vmatpush.msra.mxu0 0.0
        %558 = vmatpush.msra.mxu0 0.0
        %559 = vmatpush.msra.mxu0 0.0
        %560 = vmatpush.msra.mxu0 0.0
        %561 = vmatpush.msra.mxu0 0.0
        %562 = vmatpush.msra.mxu0 0.0
        %563 = vmatpush.msra.mxu0 0.0
        %564 = vmatpush.msra.mxu0 0.0
        %565 = vmatpush.msra.mxu0 0.0
        %566 = vmatpush.msra.mxu0 %v496
        %567 = vmatpush.msra.mxu0 %v495
        %568 = vmatpush.msra.mxu0 %v494
        %569 = vmatpush.msra.mxu0 %v493
        %570 = vmatmul.f32.gmra.mxu0 %v552
        %v571 = vpop.f32.mrf.mxu0
        %v572 = vadd.f32 %v534, %v571
        %573 = vdwg.mxu0
        %574 = vmatpush.msra.mxu0 0.0
        %575 = vmatpush.msra.mxu0 0.0
        %576 = vmatpush.msra.mxu0 0.0
        %577 = vmatpush.msra.mxu0 0.0
        %578 = vmatpush.msra.mxu0 0.0
        %579 = vmatpush.msra.mxu0 0.0
        %580 = vmatpush.msra.mxu0 0.0
        %581 = vmatpush.msra.mxu0 0.0
        %582 = vmatpush.msra.mxu0 0.0
        %583 = vmatpush.msra.mxu0 0.0
        %584 = vmatpush.msra.mxu0 0.0
        %585 = vmatpush.msra.mxu0 0.0
        %586 = vmatpush.msra.mxu0 %v500
        %587 = vmatpush.msra.mxu0 %v499
        %588 = vmatpush.msra.mxu0 %v498
        %589 = vmatpush.msra.mxu0 %v497
        %590 = vmatmul.f32.gmra.mxu0 %v552
        %v591 = vpop.f32.mrf.mxu0
        %v592 = vadd.f32 %v535, %v591
        %593 = vdwg.mxu0
        %594 = vmatpush.msra.mxu0 0.0
        %595 = vmatpush.msra.mxu0 0.0
        %596 = vmatpush.msra.mxu0 0.0
        %597 = vmatpush.msra.mxu0 0.0
        %598 = vmatpush.msra.mxu0 0.0
        %599 = vmatpush.msra.mxu0 0.0
        %600 = vmatpush.msra.mxu0 0.0
        %601 = vmatpush.msra.mxu0 0.0
        %602 = vmatpush.msra.mxu0 0.0
        %603 = vmatpush.msra.mxu0 0.0
        %604 = vmatpush.msra.mxu0 0.0
        %605 = vmatpush.msra.mxu0 0.0
        %606 = vmatpush.msra.mxu0 %v504
        %607 = vmatpush.msra.mxu0 %v503
        %608 = vmatpush.msra.mxu0 %v502
        %609 = vmatpush.msra.mxu0 %v501
        %610 = vmatmul.f32.gmra.mxu0 %v552
        %v611 = vpop.f32.mrf.mxu0
        %v612 = vadd.f32 %v536, %v611
        %613 = vdwg.mxu0
        %614 = vmatpush.msra.mxu0 0.0
        %615 = vmatpush.msra.mxu0 0.0
        %616 = vmatpush.msra.mxu0 0.0
        %617 = vmatpush.msra.mxu0 0.0
        %618 = vmatpush.msra.mxu0 0.0
        %619 = vmatpush.msra.mxu0 0.0
        %620 = vmatpush.msra.mxu0 0.0
        %621 = vmatpush.msra.mxu0 0.0
        %622 = vmatpush.msra.mxu0 0.0
        %623 = vmatpush.msra.mxu0 0.0
        %624 = vmatpush.msra.mxu0 0.0
        %625 = vmatpush.msra.mxu0 0.0
        %626 = vmatpush.msra.mxu0 %v508
        %627 = vmatpush.msra.mxu0 %v507
        %628 = vmatpush.msra.mxu0 %v506
        %629 = vmatpush.msra.mxu0 %v505
        %630 = vmatmul.f32.gmra.mxu0 %v552
        %v631 = vpop.f32.mrf.mxu0
        %v632 = vadd.f32 %v537, %v631
        %633 = vdwg.mxu0
        %634 = vmatpush.msra.mxu0 0.0
        %635 = vmatpush.msra.mxu0 0.0
        %636 = vmatpush.msra.mxu0 0.0
        %637 = vmatpush.msra.mxu0 0.0
        %638 = vmatpush.msra.mxu0 0.0
        %639 = vmatpush.msra.mxu0 0.0
        %640 = vmatpush.msra.mxu0 0.0
        %641 = vmatpush.msra.mxu0 0.0
        %642 = vmatpush.msra.mxu0 0.0
        %643 = vmatpush.msra.mxu0 0.0
        %644 = vmatpush.msra.mxu0 0.0
        %645 = vmatpush.msra.mxu0 0.0
        %646 = vmatpush.msra.mxu0 %v512
        %647 = vmatpush.msra.mxu0 %v511
        %648 = vmatpush.msra.mxu0 %v510
        %649 = vmatpush.msra.mxu0 %v509
        %650 = vmatmul.f32.gmra.mxu0 %v552
        %v651 = vpop.f32.mrf.mxu0
        %v652 = vadd.f32 %v538, %v651
        %653 = vdwg.mxu0
        %654 = vmatpush.msra.mxu0 0.0
        %655 = vmatpush.msra.mxu0 0.0
        %656 = vmatpush.msra.mxu0 0.0
        %657 = vmatpush.msra.mxu0 0.0
        %658 = vmatpush.msra.mxu0 0.0
        %659 = vmatpush.msra.mxu0 0.0
        %660 = vmatpush.msra.mxu0 0.0
        %661 = vmatpush.msra.mxu0 0.0
        %662 = vmatpush.msra.mxu0 0.0
        %663 = vmatpush.msra.mxu0 0.0
        %664 = vmatpush.msra.mxu0 0.0
        %665 = vmatpush.msra.mxu0 0.0
        %666 = vmatpush.msra.mxu0 %v516
        %667 = vmatpush.msra.mxu0 %v515
        %668 = vmatpush.msra.mxu0 %v514
        %669 = vmatpush.msra.mxu0 %v513
        %670 = vmatmul.f32.gmra.mxu0 %v552
        %v671 = vpop.f32.mrf.mxu0
        %v672 = vadd.f32 %v539, %v671
        %673 = vdwg.mxu0
        %674 = vmatpush.msra.mxu0 0.0
        %675 = vmatpush.msra.mxu0 0.0
        %676 = vmatpush.msra.mxu0 0.0
        %677 = vmatpush.msra.mxu0 0.0
        %678 = vmatpush.msra.mxu0 0.0
        %679 = vmatpush.msra.mxu0 0.0
        %680 = vmatpush.msra.mxu0 0.0
        %681 = vmatpush.msra.mxu0 0.0
        %682 = vmatpush.msra.mxu0 0.0
        %683 = vmatpush.msra.mxu0 0.0
        %684 = vmatpush.msra.mxu0 0.0
        %685 = vmatpush.msra.mxu0 0.0
        %686 = vmatpush.msra.mxu0 %v520
        %687 = vmatpush.msra.mxu0 %v519
        %688 = vmatpush.msra.mxu0 %v518
        %689 = vmatpush.msra.mxu0 %v517
        %690 = vmatmul.f32.gmra.mxu0 %v552
        %v691 = vpop.f32.mrf.mxu0
        %v692 = vadd.f32 %v540, %v691
        %693 = vdwg.mxu0
        %694 = vmatpush.msra.mxu0 0.0
        %695 = vmatpush.msra.mxu0 0.0
        %696 = vmatpush.msra.mxu0 0.0
        %697 = vmatpush.msra.mxu0 0.0
        %698 = vmatpush.msra.mxu0 0.0
        %699 = vmatpush.msra.mxu0 0.0
        %700 = vmatpush.msra.mxu0 0.0
        %701 = vmatpush.msra.mxu0 0.0
        %702 = vmatpush.msra.mxu0 0.0
        %703 = vmatpush.msra.mxu0 0.0
        %704 = vmatpush.msra.mxu0 0.0
        %705 = vmatpush.msra.mxu0 0.0
        %706 = vmatpush.msra.mxu0 %v524
        %707 = vmatpush.msra.mxu0 %v523
        %708 = vmatpush.msra.mxu0 %v522
        %709 = vmatpush.msra.mxu0 %v521
        %710 = vmatmul.f32.gmra.mxu0 %v552
        %v711 = vpop.f32.mrf.mxu0
        %v712 = vadd.f32 %v541, %v711
        %713 = vdwg.mxu0
        %v714 = vld [vmem:[%s2] sm:$0xff]
        %v715 = vld [vmem:[%s2 + $0x8] sm:$0xff]
        %v716 = vld [vmem:[%s2 + $0x10] sm:$0xff]
        %v717 = vld [vmem:[%s2 + $0x18] sm:$0xff]
        %v718 = vld [vmem:[%s2 + $0x20] sm:$0xff]
        %v719 = vld [vmem:[%s2 + $0x28] sm:$0xff]
        %v720 = vld [vmem:[%s2 + $0x30] sm:$0xff]
        %v721 = vld [vmem:[%s2 + $0x38] sm:$0xff]
        %v722 = vld [vmem:[%s2 + $0x40] sm:$0xff]
        %v723 = vld [vmem:[%s2 + $0x48] sm:$0xff]
        %v724 = vld [vmem:[%s2 + $0x50] sm:$0xff]
        %v725 = vld [vmem:[%s2 + $0x58] sm:$0xff]
        %v726 = vld [vmem:[%s2 + $0x60] sm:$0xff]
        %v727 = vld [vmem:[%s2 + $0x68] sm:$0xff]
        %v728 = vld [vmem:[%s2 + $0x70] sm:$0xff]
        %v729 = vld [vmem:[%s2 + $0x78] sm:$0xff]
        %v730 = vld [vmem:[%s2 + $0x80] sm:$0xff]
        %v731 = vld [vmem:[%s2 + $0x88] sm:$0xff]
        %v732 = vld [vmem:[%s2 + $0x90] sm:$0xff]
        %v733 = vld [vmem:[%s2 + $0x98] sm:$0xff]
        %v734 = vld [vmem:[%s2 + $0xa0] sm:$0xff]
        %v735 = vld [vmem:[%s2 + $0xa8] sm:$0xff]
        %v736 = vld [vmem:[%s2 + $0xb0] sm:$0xff]
        %v737 = vld [vmem:[%s2 + $0xb8] sm:$0xff]
        %v738 = vld [vmem:[%s2 + $0xc0] sm:$0xff]
        %v739 = vld [vmem:[%s2 + $0xc8] sm:$0xff]
        %v740 = vld [vmem:[%s2 + $0xd0] sm:$0xff]
        %v741 = vld [vmem:[%s2 + $0xd8] sm:$0xff]
        %v742 = vld [vmem:[%s2 + $0xe0] sm:$0xff]
        %v743 = vld [vmem:[%s2 + $0xe8] sm:$0xff]
        %v744 = vld [vmem:[%s2 + $0xf0] sm:$0xff]
        %v745 = vld [vmem:[%s2 + $0xf8] sm:$0xff]
        %v746 = vld [vmem:[%s5] sm:$0xff]
        %v748 = vrot.slane %v746, 1
        %v749 = vrot.slane %v746, 2
        %v750 = vrot.slane %v746, 3
        %v751 = vrot.slane %v746, 4
        %v752 = vrot.slane %v746, 5
        %v753 = vrot.slane %v746, 6
        %v754 = vrot.slane %v746, 7
        %v755 = vperm.slane %v746, 0
        %v756 = vperm.slane %v748, 0
        %v757 = vperm.slane %v749, 0
        %v758 = vperm.slane %v750, 0
        %v759 = vperm.slane %v751, 0
        %v760 = vperm.slane %v752, 0
        %v761 = vperm.slane %v753, 0
        %v762 = vperm.slane %v754, 0
        %771 = vmatpush.msra.mxu0 0.0
        %772 = vmatpush.msra.mxu0 0.0
        %773 = vmatpush.msra.mxu0 0.0
        %774 = vmatpush.msra.mxu0 0.0
        %775 = vmatpush.msra.mxu0 0.0
        %776 = vmatpush.msra.mxu0 0.0
        %777 = vmatpush.msra.mxu0 0.0
        %778 = vmatpush.msra.mxu0 0.0
        %779 = vmatpush.msra.mxu0 0.0
        %780 = vmatpush.msra.mxu0 0.0
        %781 = vmatpush.msra.mxu0 0.0
        %782 = vmatpush.msra.mxu0 0.0
        %783 = vmatpush.msra.mxu0 %v717
        %784 = vmatpush.msra.mxu0 %v716
        %785 = vmatpush.msra.mxu0 %v715
        %786 = vmatpush.msra.mxu0 %v714
        %787 = vmatmul.f32.gmra.mxu0 %v552
        %v788 = vpop.f32.mrf.mxu0
        %v789 = vadd.f32 %v755, %v788
        %790 = vdwg.mxu0
        %791 = vmatpush.msra.mxu0 0.0
        %792 = vmatpush.msra.mxu0 0.0
        %793 = vmatpush.msra.mxu0 0.0
        %794 = vmatpush.msra.mxu0 0.0
        %795 = vmatpush.msra.mxu0 0.0
        %796 = vmatpush.msra.mxu0 0.0
        %797 = vmatpush.msra.mxu0 0.0
        %798 = vmatpush.msra.mxu0 0.0
        %799 = vmatpush.msra.mxu0 0.0
        %800 = vmatpush.msra.mxu0 0.0
        %801 = vmatpush.msra.mxu0 0.0
        %802 = vmatpush.msra.mxu0 0.0
        %803 = vmatpush.msra.mxu0 %v721
        %804 = vmatpush.msra.mxu0 %v720
        %805 = vmatpush.msra.mxu0 %v719
        %806 = vmatpush.msra.mxu0 %v718
        %807 = vmatmul.f32.gmra.mxu0 %v552
        %v808 = vpop.f32.mrf.mxu0
        %v809 = vadd.f32 %v756, %v808
        %810 = vdwg.mxu0
        %811 = vmatpush.msra.mxu0 0.0
        %812 = vmatpush.msra.mxu0 0.0
        %813 = vmatpush.msra.mxu0 0.0
        %814 = vmatpush.msra.mxu0 0.0
        %815 = vmatpush.msra.mxu0 0.0
        %816 = vmatpush.msra.mxu0 0.0
        %817 = vmatpush.msra.mxu0 0.0
        %818 = vmatpush.msra.mxu0 0.0
        %819 = vmatpush.msra.mxu0 0.0
        %820 = vmatpush.msra.mxu0 0.0
        %821 = vmatpush.msra.mxu0 0.0
        %822 = vmatpush.msra.mxu0 0.0
        %823 = vmatpush.msra.mxu0 %v725
        %824 = vmatpush.msra.mxu0 %v724
        %825 = vmatpush.msra.mxu0 %v723
        %826 = vmatpush.msra.mxu0 %v722
        %827 = vmatmul.f32.gmra.mxu0 %v552
        %v828 = vpop.f32.mrf.mxu0
        %v829 = vadd.f32 %v757, %v828
        %830 = vdwg.mxu0
        %831 = vmatpush.msra.mxu0 0.0
        %832 = vmatpush.msra.mxu0 0.0
        %833 = vmatpush.msra.mxu0 0.0
        %834 = vmatpush.msra.mxu0 0.0
        %835 = vmatpush.msra.mxu0 0.0
        %836 = vmatpush.msra.mxu0 0.0
        %837 = vmatpush.msra.mxu0 0.0
        %838 = vmatpush.msra.mxu0 0.0
        %839 = vmatpush.msra.mxu0 0.0
        %840 = vmatpush.msra.mxu0 0.0
        %841 = vmatpush.msra.mxu0 0.0
        %842 = vmatpush.msra.mxu0 0.0
        %843 = vmatpush.msra.mxu0 %v729
        %844 = vmatpush.msra.mxu0 %v728
        %845 = vmatpush.msra.mxu0 %v727
        %846 = vmatpush.msra.mxu0 %v726
        %847 = vmatmul.f32.gmra.mxu0 %v552
        %v848 = vpop.f32.mrf.mxu0
        %v849 = vadd.f32 %v758, %v848
        %850 = vdwg.mxu0
        %851 = vmatpush.msra.mxu0 0.0
        %852 = vmatpush.msra.mxu0 0.0
        %853 = vmatpush.msra.mxu0 0.0
        %854 = vmatpush.msra.mxu0 0.0
        %855 = vmatpush.msra.mxu0 0.0
        %856 = vmatpush.msra.mxu0 0.0
        %857 = vmatpush.msra.mxu0 0.0
        %858 = vmatpush.msra.mxu0 0.0
        %859 = vmatpush.msra.mxu0 0.0
        %860 = vmatpush.msra.mxu0 0.0
        %861 = vmatpush.msra.mxu0 0.0
        %862 = vmatpush.msra.mxu0 0.0
        %863 = vmatpush.msra.mxu0 %v733
        %864 = vmatpush.msra.mxu0 %v732
        %865 = vmatpush.msra.mxu0 %v731
        %866 = vmatpush.msra.mxu0 %v730
        %867 = vmatmul.f32.gmra.mxu0 %v552
        %v868 = vpop.f32.mrf.mxu0
        %v869 = vadd.f32 %v759, %v868
        %870 = vdwg.mxu0
        %871 = vmatpush.msra.mxu0 0.0
        %872 = vmatpush.msra.mxu0 0.0
        %873 = vmatpush.msra.mxu0 0.0
        %874 = vmatpush.msra.mxu0 0.0
        %875 = vmatpush.msra.mxu0 0.0
        %876 = vmatpush.msra.mxu0 0.0
        %877 = vmatpush.msra.mxu0 0.0
        %878 = vmatpush.msra.mxu0 0.0
        %879 = vmatpush.msra.mxu0 0.0
        %880 = vmatpush.msra.mxu0 0.0
        %881 = vmatpush.msra.mxu0 0.0
        %882 = vmatpush.msra.mxu0 0.0
        %883 = vmatpush.msra.mxu0 %v737
        %884 = vmatpush.msra.mxu0 %v736
        %885 = vmatpush.msra.mxu0 %v735
        %886 = vmatpush.msra.mxu0 %v734
        %887 = vmatmul.f32.gmra.mxu0 %v552
        %v888 = vpop.f32.mrf.mxu0
        %v889 = vadd.f32 %v760, %v888
        %890 = vdwg.mxu0
        %891 = vmatpush.msra.mxu0 0.0
        %892 = vmatpush.msra.mxu0 0.0
        %893 = vmatpush.msra.mxu0 0.0
        %894 = vmatpush.msra.mxu0 0.0
        %895 = vmatpush.msra.mxu0 0.0
        %896 = vmatpush.msra.mxu0 0.0
        %897 = vmatpush.msra.mxu0 0.0
        %898 = vmatpush.msra.mxu0 0.0
        %899 = vmatpush.msra.mxu0 0.0
        %900 = vmatpush.msra.mxu0 0.0
        %901 = vmatpush.msra.mxu0 0.0
        %902 = vmatpush.msra.mxu0 0.0
        %903 = vmatpush.msra.mxu0 %v741
        %904 = vmatpush.msra.mxu0 %v740
        %905 = vmatpush.msra.mxu0 %v739
        %906 = vmatpush.msra.mxu0 %v738
        %907 = vmatmul.f32.gmra.mxu0 %v552
        %v908 = vpop.f32.mrf.mxu0
        %v909 = vadd.f32 %v761, %v908
        %910 = vdwg.mxu0
        %911 = vmatpush.msra.mxu0 0.0
        %912 = vmatpush.msra.mxu0 0.0
        %913 = vmatpush.msra.mxu0 0.0
        %914 = vmatpush.msra.mxu0 0.0
        %915 = vmatpush.msra.mxu0 0.0
        %916 = vmatpush.msra.mxu0 0.0
        %917 = vmatpush.msra.mxu0 0.0
        %918 = vmatpush.msra.mxu0 0.0
        %919 = vmatpush.msra.mxu0 0.0
        %920 = vmatpush.msra.mxu0 0.0
        %921 = vmatpush.msra.mxu0 0.0
        %922 = vmatpush.msra.mxu0 0.0
        %923 = vmatpush.msra.mxu0 %v745
        %924 = vmatpush.msra.mxu0 %v744
        %925 = vmatpush.msra.mxu0 %v743
        %926 = vmatpush.msra.mxu0 %v742
        %927 = vmatmul.f32.gmra.mxu0 %v552
        %v928 = vpop.f32.mrf.mxu0
        %v929 = vadd.f32 %v762, %v928
        %930 = vdwg.mxu0
        %v931 = vld [vmem:[%s3] sm:$0xff]
        %v932 = vld [vmem:[%s3 + $0x8] sm:$0xff]
        %v933 = vld [vmem:[%s3 + $0x10] sm:$0xff]
        %v934 = vld [vmem:[%s3 + $0x18] sm:$0xff]
        %v935 = vld [vmem:[%s3 + $0x20] sm:$0xff]
        %v936 = vld [vmem:[%s3 + $0x28] sm:$0xff]
        %v937 = vld [vmem:[%s3 + $0x30] sm:$0xff]
        %v938 = vld [vmem:[%s3 + $0x38] sm:$0xff]
        %v939 = vld [vmem:[%s3 + $0x40] sm:$0xff]
        %v940 = vld [vmem:[%s3 + $0x48] sm:$0xff]
        %v941 = vld [vmem:[%s3 + $0x50] sm:$0xff]
        %v942 = vld [vmem:[%s3 + $0x58] sm:$0xff]
        %v943 = vld [vmem:[%s3 + $0x60] sm:$0xff]
        %v944 = vld [vmem:[%s3 + $0x68] sm:$0xff]
        %v945 = vld [vmem:[%s3 + $0x70] sm:$0xff]
        %v946 = vld [vmem:[%s3 + $0x78] sm:$0xff]
        %v947 = vld [vmem:[%s3 + $0x80] sm:$0xff]
        %v948 = vld [vmem:[%s3 + $0x88] sm:$0xff]
        %v949 = vld [vmem:[%s3 + $0x90] sm:$0xff]
        %v950 = vld [vmem:[%s3 + $0x98] sm:$0xff]
        %v951 = vld [vmem:[%s3 + $0xa0] sm:$0xff]
        %v952 = vld [vmem:[%s3 + $0xa8] sm:$0xff]
        %v953 = vld [vmem:[%s3 + $0xb0] sm:$0xff]
        %v954 = vld [vmem:[%s3 + $0xb8] sm:$0xff]
        %v955 = vld [vmem:[%s3 + $0xc0] sm:$0xff]
        %v956 = vld [vmem:[%s3 + $0xc8] sm:$0xff]
        %v957 = vld [vmem:[%s3 + $0xd0] sm:$0xff]
        %v958 = vld [vmem:[%s3 + $0xd8] sm:$0xff]
        %v959 = vld [vmem:[%s3 + $0xe0] sm:$0xff]
        %v960 = vld [vmem:[%s3 + $0xe8] sm:$0xff]
        %v961 = vld [vmem:[%s3 + $0xf0] sm:$0xff]
        %v962 = vld [vmem:[%s3 + $0xf8] sm:$0xff]
        %v963 = vld [vmem:[%s6] sm:$0xff]
        %v965 = vrot.slane %v963, 1
        %v966 = vrot.slane %v963, 2
        %v967 = vrot.slane %v963, 3
        %v968 = vrot.slane %v963, 4
        %v969 = vrot.slane %v963, 5
        %v970 = vrot.slane %v963, 6
        %v971 = vrot.slane %v963, 7
        %v972 = vperm.slane %v963, 0
        %v973 = vperm.slane %v965, 0
        %v974 = vperm.slane %v966, 0
        %v975 = vperm.slane %v967, 0
        %v976 = vperm.slane %v968, 0
        %v977 = vperm.slane %v969, 0
        %v978 = vperm.slane %v970, 0
        %v979 = vperm.slane %v971, 0
        %988 = vmatpush.msra.mxu0 0.0
        %989 = vmatpush.msra.mxu0 0.0
        %990 = vmatpush.msra.mxu0 0.0
        %991 = vmatpush.msra.mxu0 0.0
        %992 = vmatpush.msra.mxu0 0.0
        %993 = vmatpush.msra.mxu0 0.0
        %994 = vmatpush.msra.mxu0 0.0
        %995 = vmatpush.msra.mxu0 0.0
        %996 = vmatpush.msra.mxu0 0.0
        %997 = vmatpush.msra.mxu0 0.0
        %998 = vmatpush.msra.mxu0 0.0
        %999 = vmatpush.msra.mxu0 0.0
        %1000 = vmatpush.msra.mxu0 %v934
        %1001 = vmatpush.msra.mxu0 %v933
        %1002 = vmatpush.msra.mxu0 %v932
        %1003 = vmatpush.msra.mxu0 %v931
        %1004 = vmatmul.f32.gmra.mxu0 %v552
        %v1005 = vpop.f32.mrf.mxu0
        %v1006 = vadd.f32 %v972, %v1005
        %1007 = vdwg.mxu0
        %1008 = vmatpush.msra.mxu0 0.0
        %1009 = vmatpush.msra.mxu0 0.0
        %1010 = vmatpush.msra.mxu0 0.0
        %1011 = vmatpush.msra.mxu0 0.0
        %1012 = vmatpush.msra.mxu0 0.0
        %1013 = vmatpush.msra.mxu0 0.0
        %1014 = vmatpush.msra.mxu0 0.0
        %1015 = vmatpush.msra.mxu0 0.0
        %1016 = vmatpush.msra.mxu0 0.0
        %1017 = vmatpush.msra.mxu0 0.0
        %1018 = vmatpush.msra.mxu0 0.0
        %1019 = vmatpush.msra.mxu0 0.0
        %1020 = vmatpush.msra.mxu0 %v938
        %1021 = vmatpush.msra.mxu0 %v937
        %1022 = vmatpush.msra.mxu0 %v936
        %1023 = vmatpush.msra.mxu0 %v935
        %1024 = vmatmul.f32.gmra.mxu0 %v552
        %v1025 = vpop.f32.mrf.mxu0
        %v1026 = vadd.f32 %v973, %v1025
        %1027 = vdwg.mxu0
        %1028 = vmatpush.msra.mxu0 0.0
        %1029 = vmatpush.msra.mxu0 0.0
        %1030 = vmatpush.msra.mxu0 0.0
        %1031 = vmatpush.msra.mxu0 0.0
        %1032 = vmatpush.msra.mxu0 0.0
        %1033 = vmatpush.msra.mxu0 0.0
        %1034 = vmatpush.msra.mxu0 0.0
        %1035 = vmatpush.msra.mxu0 0.0
        %1036 = vmatpush.msra.mxu0 0.0
        %1037 = vmatpush.msra.mxu0 0.0
        %1038 = vmatpush.msra.mxu0 0.0
        %1039 = vmatpush.msra.mxu0 0.0
        %1040 = vmatpush.msra.mxu0 %v942
        %1041 = vmatpush.msra.mxu0 %v941
        %1042 = vmatpush.msra.mxu0 %v940
        %1043 = vmatpush.msra.mxu0 %v939
        %1044 = vmatmul.f32.gmra.mxu0 %v552
        %v1045 = vpop.f32.mrf.mxu0
        %v1046 = vadd.f32 %v974, %v1045
        %1047 = vdwg.mxu0
        %1048 = vmatpush.msra.mxu0 0.0
        %1049 = vmatpush.msra.mxu0 0.0
        %1050 = vmatpush.msra.mxu0 0.0
        %1051 = vmatpush.msra.mxu0 0.0
        %1052 = vmatpush.msra.mxu0 0.0
        %1053 = vmatpush.msra.mxu0 0.0
        %1054 = vmatpush.msra.mxu0 0.0
        %1055 = vmatpush.msra.mxu0 0.0
        %1056 = vmatpush.msra.mxu0 0.0
        %1057 = vmatpush.msra.mxu0 0.0
        %1058 = vmatpush.msra.mxu0 0.0
        %1059 = vmatpush.msra.mxu0 0.0
        %1060 = vmatpush.msra.mxu0 %v946
        %1061 = vmatpush.msra.mxu0 %v945
        %1062 = vmatpush.msra.mxu0 %v944
        %1063 = vmatpush.msra.mxu0 %v943
        %1064 = vmatmul.f32.gmra.mxu0 %v552
        %v1065 = vpop.f32.mrf.mxu0
        %v1066 = vadd.f32 %v975, %v1065
        %1067 = vdwg.mxu0
        %1068 = vmatpush.msra.mxu0 0.0
        %1069 = vmatpush.msra.mxu0 0.0
        %1070 = vmatpush.msra.mxu0 0.0
        %1071 = vmatpush.msra.mxu0 0.0
        %1072 = vmatpush.msra.mxu0 0.0
        %1073 = vmatpush.msra.mxu0 0.0
        %1074 = vmatpush.msra.mxu0 0.0
        %1075 = vmatpush.msra.mxu0 0.0
        %1076 = vmatpush.msra.mxu0 0.0
        %1077 = vmatpush.msra.mxu0 0.0
        %1078 = vmatpush.msra.mxu0 0.0
        %1079 = vmatpush.msra.mxu0 0.0
        %1080 = vmatpush.msra.mxu0 %v950
        %1081 = vmatpush.msra.mxu0 %v949
        %1082 = vmatpush.msra.mxu0 %v948
        %1083 = vmatpush.msra.mxu0 %v947
        %1084 = vmatmul.f32.gmra.mxu0 %v552
        %v1085 = vpop.f32.mrf.mxu0
        %v1086 = vadd.f32 %v976, %v1085
        %1087 = vdwg.mxu0
        %1088 = vmatpush.msra.mxu0 0.0
        %1089 = vmatpush.msra.mxu0 0.0
        %1090 = vmatpush.msra.mxu0 0.0
        %1091 = vmatpush.msra.mxu0 0.0
        %1092 = vmatpush.msra.mxu0 0.0
        %1093 = vmatpush.msra.mxu0 0.0
        %1094 = vmatpush.msra.mxu0 0.0
        %1095 = vmatpush.msra.mxu0 0.0
        %1096 = vmatpush.msra.mxu0 0.0
        %1097 = vmatpush.msra.mxu0 0.0
        %1098 = vmatpush.msra.mxu0 0.0
        %1099 = vmatpush.msra.mxu0 0.0
        %1100 = vmatpush.msra.mxu0 %v954
        %1101 = vmatpush.msra.mxu0 %v953
        %1102 = vmatpush.msra.mxu0 %v952
        %1103 = vmatpush.msra.mxu0 %v951
        %1104 = vmatmul.f32.gmra.mxu0 %v552
        %v1105 = vpop.f32.mrf.mxu0
        %v1106 = vadd.f32 %v977, %v1105
        %1107 = vdwg.mxu0
        %1108 = vmatpush.msra.mxu0 0.0
        %1109 = vmatpush.msra.mxu0 0.0
        %1110 = vmatpush.msra.mxu0 0.0
        %1111 = vmatpush.msra.mxu0 0.0
        %1112 = vmatpush.msra.mxu0 0.0
        %1113 = vmatpush.msra.mxu0 0.0
        %1114 = vmatpush.msra.mxu0 0.0
        %1115 = vmatpush.msra.mxu0 0.0
        %1116 = vmatpush.msra.mxu0 0.0
        %1117 = vmatpush.msra.mxu0 0.0
        %1118 = vmatpush.msra.mxu0 0.0
        %1119 = vmatpush.msra.mxu0 0.0
        %1120 = vmatpush.msra.mxu0 %v958
        %1121 = vmatpush.msra.mxu0 %v957
        %1122 = vmatpush.msra.mxu0 %v956
        %1123 = vmatpush.msra.mxu0 %v955
        %1124 = vmatmul.f32.gmra.mxu0 %v552
        %v1125 = vpop.f32.mrf.mxu0
        %v1126 = vadd.f32 %v978, %v1125
        %1127 = vdwg.mxu0
        %1128 = vmatpush.msra.mxu0 0.0
        %1129 = vmatpush.msra.mxu0 0.0
        %1130 = vmatpush.msra.mxu0 0.0
        %1131 = vmatpush.msra.mxu0 0.0
        %1132 = vmatpush.msra.mxu0 0.0
        %1133 = vmatpush.msra.mxu0 0.0
        %1134 = vmatpush.msra.mxu0 0.0
        %1135 = vmatpush.msra.mxu0 0.0
        %1136 = vmatpush.msra.mxu0 0.0
        %1137 = vmatpush.msra.mxu0 0.0
        %1138 = vmatpush.msra.mxu0 0.0
        %1139 = vmatpush.msra.mxu0 0.0
        %1140 = vmatpush.msra.mxu0 %v962
        %1141 = vmatpush.msra.mxu0 %v961
        %1142 = vmatpush.msra.mxu0 %v960
        %1143 = vmatpush.msra.mxu0 %v959
        %1144 = vmatmul.f32.gmra.mxu0 %v552
        %v1145 = vpop.f32.mrf.mxu0
        %v1146 = vadd.f32 %v979, %v1145
        %1147 = vdwg.mxu0
        %vm1148 = vcmask 64512
        %v1150 = vsel %vm1148, %v572, 0
        %v1153 = vsel %vm1148, %v789, 0
        %1155 = vmatpush.xpose.msra.mxu0 0.0
        %1156 = vmatpush.xpose.msra.mxu0 0.0
        %1157 = vmatpush.xpose.msra.mxu0 0.0
        %1158 = vmatpush.xpose.msra.mxu0 0.0
        %1159 = vmatpush.xpose.msra.mxu0 0.0
        %1160 = vmatpush.xpose.msra.mxu0 0.0
        %1161 = vmatpush.xpose.msra.mxu0 0.0
        %1162 = vmatpush.xpose.msra.mxu0 0.0
        %1163 = vmatpush.xpose.msra.mxu0 0.0
        %1164 = vmatpush.xpose.msra.mxu0 0.0
        %1165 = vmatpush.xpose.msra.mxu0 0.0
        %1166 = vmatpush.xpose.msra.mxu0 0.0
        %1167 = vmatpush.xpose.msra.mxu0 0.0
        %1168 = vmatpush.xpose.msra.mxu0 0.0
        %1169 = vmatpush.xpose.msra.mxu0 0.0
        %1170 = vmatpush.xpose.msra.mxu0 %v1153
        %1171 = vmatmul.f32.gmra.mxu0 %v1150
        %v1172 = vpop.f32.mrf.mxu0
        %v1173 = vadd.f32 0.0, %v1172
        %1174 = vdwg.mxu0
        %v1176 = vsel %vm1148, %v592, 0
        %v1179 = vsel %vm1148, %v809, 0
        %1181 = vmatpush.xpose.msra.mxu0 0.0
        %1182 = vmatpush.xpose.msra.mxu0 0.0
        %1183 = vmatpush.xpose.msra.mxu0 0.0
        %1184 = vmatpush.xpose.msra.mxu0 0.0
        %1185 = vmatpush.xpose.msra.mxu0 0.0
        %1186 = vmatpush.xpose.msra.mxu0 0.0
        %1187 = vmatpush.xpose.msra.mxu0 0.0
        %1188 = vmatpush.xpose.msra.mxu0 0.0
        %1189 = vmatpush.xpose.msra.mxu0 0.0
        %1190 = vmatpush.xpose.msra.mxu0 0.0
        %1191 = vmatpush.xpose.msra.mxu0 0.0
        %1192 = vmatpush.xpose.msra.mxu0 0.0
        %1193 = vmatpush.xpose.msra.mxu0 0.0
        %1194 = vmatpush.xpose.msra.mxu0 0.0
        %1195 = vmatpush.xpose.msra.mxu0 0.0
        %1196 = vmatpush.xpose.msra.mxu0 %v1179
        %1197 = vmatmul.f32.gmra.mxu0 %v1176
        %v1198 = vpop.f32.mrf.mxu0
        %v1199 = vadd.f32 0.0, %v1198
        %1200 = vdwg.mxu0
        %v1202 = vsel %vm1148, %v612, 0
        %v1205 = vsel %vm1148, %v829, 0
        %1207 = vmatpush.xpose.msra.mxu0 0.0
        %1208 = vmatpush.xpose.msra.mxu0 0.0
        %1209 = vmatpush.xpose.msra.mxu0 0.0
        %1210 = vmatpush.xpose.msra.mxu0 0.0
        %1211 = vmatpush.xpose.msra.mxu0 0.0
        %1212 = vmatpush.xpose.msra.mxu0 0.0
        %1213 = vmatpush.xpose.msra.mxu0 0.0
        %1214 = vmatpush.xpose.msra.mxu0 0.0
        %1215 = vmatpush.xpose.msra.mxu0 0.0
        %1216 = vmatpush.xpose.msra.mxu0 0.0
        %1217 = vmatpush.xpose.msra.mxu0 0.0
        %1218 = vmatpush.xpose.msra.mxu0 0.0
        %1219 = vmatpush.xpose.msra.mxu0 0.0
        %1220 = vmatpush.xpose.msra.mxu0 0.0
        %1221 = vmatpush.xpose.msra.mxu0 0.0
        %1222 = vmatpush.xpose.msra.mxu0 %v1205
        %1223 = vmatmul.f32.gmra.mxu0 %v1202
        %v1224 = vpop.f32.mrf.mxu0
        %v1225 = vadd.f32 0.0, %v1224
        %1226 = vdwg.mxu0
        %v1228 = vsel %vm1148, %v632, 0
        %v1231 = vsel %vm1148, %v849, 0
        %1233 = vmatpush.xpose.msra.mxu0 0.0
        %1234 = vmatpush.xpose.msra.mxu0 0.0
        %1235 = vmatpush.xpose.msra.mxu0 0.0
        %1236 = vmatpush.xpose.msra.mxu0 0.0
        %1237 = vmatpush.xpose.msra.mxu0 0.0
        %1238 = vmatpush.xpose.msra.mxu0 0.0
        %1239 = vmatpush.xpose.msra.mxu0 0.0
        %1240 = vmatpush.xpose.msra.mxu0 0.0
        %1241 = vmatpush.xpose.msra.mxu0 0.0
        %1242 = vmatpush.xpose.msra.mxu0 0.0
        %1243 = vmatpush.xpose.msra.mxu0 0.0
        %1244 = vmatpush.xpose.msra.mxu0 0.0
        %1245 = vmatpush.xpose.msra.mxu0 0.0
        %1246 = vmatpush.xpose.msra.mxu0 0.0
        %1247 = vmatpush.xpose.msra.mxu0 0.0
        %1248 = vmatpush.xpose.msra.mxu0 %v1231
        %1249 = vmatmul.f32.gmra.mxu0 %v1228
        %v1250 = vpop.f32.mrf.mxu0
        %v1251 = vadd.f32 0.0, %v1250
        %1252 = vdwg.mxu0
        %v1254 = vsel %vm1148, %v652, 0
        %v1257 = vsel %vm1148, %v869, 0
        %1259 = vmatpush.xpose.msra.mxu0 0.0
        %1260 = vmatpush.xpose.msra.mxu0 0.0
        %1261 = vmatpush.xpose.msra.mxu0 0.0
        %1262 = vmatpush.xpose.msra.mxu0 0.0
        %1263 = vmatpush.xpose.msra.mxu0 0.0
        %1264 = vmatpush.xpose.msra.mxu0 0.0
        %1265 = vmatpush.xpose.msra.mxu0 0.0
        %1266 = vmatpush.xpose.msra.mxu0 0.0
        %1267 = vmatpush.xpose.msra.mxu0 0.0
        %1268 = vmatpush.xpose.msra.mxu0 0.0
        %1269 = vmatpush.xpose.msra.mxu0 0.0
        %1270 = vmatpush.xpose.msra.mxu0 0.0
        %1271 = vmatpush.xpose.msra.mxu0 0.0
        %1272 = vmatpush.xpose.msra.mxu0 0.0
        %1273 = vmatpush.xpose.msra.mxu0 0.0
        %1274 = vmatpush.xpose.msra.mxu0 %v1257
        %1275 = vmatmul.f32.gmra.mxu0 %v1254
        %v1276 = vpop.f32.mrf.mxu0
        %v1277 = vadd.f32 0.0, %v1276
        %1278 = vdwg.mxu0
        %v1280 = vsel %vm1148, %v672, 0
        %v1283 = vsel %vm1148, %v889, 0
        %1285 = vmatpush.xpose.msra.mxu0 0.0
        %1286 = vmatpush.xpose.msra.mxu0 0.0
        %1287 = vmatpush.xpose.msra.mxu0 0.0
        %1288 = vmatpush.xpose.msra.mxu0 0.0
        %1289 = vmatpush.xpose.msra.mxu0 0.0
        %1290 = vmatpush.xpose.msra.mxu0 0.0
        %1291 = vmatpush.xpose.msra.mxu0 0.0
        %1292 = vmatpush.xpose.msra.mxu0 0.0
        %1293 = vmatpush.xpose.msra.mxu0 0.0
        %1294 = vmatpush.xpose.msra.mxu0 0.0
        %1295 = vmatpush.xpose.msra.mxu0 0.0
        %1296 = vmatpush.xpose.msra.mxu0 0.0
        %1297 = vmatpush.xpose.msra.mxu0 0.0
        %1298 = vmatpush.xpose.msra.mxu0 0.0
        %1299 = vmatpush.xpose.msra.mxu0 0.0
        %1300 = vmatpush.xpose.msra.mxu0 %v1283
        %1301 = vmatmul.f32.gmra.mxu0 %v1280
        %v1302 = vpop.f32.mrf.mxu0
        %v1303 = vadd.f32 0.0, %v1302
        %1304 = vdwg.mxu0
        %v1306 = vsel %vm1148, %v692, 0
        %v1309 = vsel %vm1148, %v909, 0
        %1311 = vmatpush.xpose.msra.mxu0 0.0
        %1312 = vmatpush.xpose.msra.mxu0 0.0
        %1313 = vmatpush.xpose.msra.mxu0 0.0
        %1314 = vmatpush.xpose.msra.mxu0 0.0
        %1315 = vmatpush.xpose.msra.mxu0 0.0
        %1316 = vmatpush.xpose.msra.mxu0 0.0
        %1317 = vmatpush.xpose.msra.mxu0 0.0
        %1318 = vmatpush.xpose.msra.mxu0 0.0
        %1319 = vmatpush.xpose.msra.mxu0 0.0
        %1320 = vmatpush.xpose.msra.mxu0 0.0
        %1321 = vmatpush.xpose.msra.mxu0 0.0
        %1322 = vmatpush.xpose.msra.mxu0 0.0
        %1323 = vmatpush.xpose.msra.mxu0 0.0
        %1324 = vmatpush.xpose.msra.mxu0 0.0
        %1325 = vmatpush.xpose.msra.mxu0 0.0
        %1326 = vmatpush.xpose.msra.mxu0 %v1309
        %1327 = vmatmul.f32.gmra.mxu0 %v1306
        %v1328 = vpop.f32.mrf.mxu0
        %v1329 = vadd.f32 0.0, %v1328
        %1330 = vdwg.mxu0
        %v1332 = vsel %vm1148, %v712, 0
        %v1335 = vsel %vm1148, %v929, 0
        %1337 = vmatpush.xpose.msra.mxu0 0.0
        %1338 = vmatpush.xpose.msra.mxu0 0.0
        %1339 = vmatpush.xpose.msra.mxu0 0.0
        %1340 = vmatpush.xpose.msra.mxu0 0.0
        %1341 = vmatpush.xpose.msra.mxu0 0.0
        %1342 = vmatpush.xpose.msra.mxu0 0.0
        %1343 = vmatpush.xpose.msra.mxu0 0.0
        %1344 = vmatpush.xpose.msra.mxu0 0.0
        %1345 = vmatpush.xpose.msra.mxu0 0.0
        %1346 = vmatpush.xpose.msra.mxu0 0.0
        %1347 = vmatpush.xpose.msra.mxu0 0.0
        %1348 = vmatpush.xpose.msra.mxu0 0.0
        %1349 = vmatpush.xpose.msra.mxu0 0.0
        %1350 = vmatpush.xpose.msra.mxu0 0.0
        %1351 = vmatpush.xpose.msra.mxu0 0.0
        %1352 = vmatpush.xpose.msra.mxu0 %v1335
        %1353 = vmatmul.f32.gmra.mxu0 %v1332
        %v1354 = vpop.f32.mrf.mxu0
        %v1355 = vadd.f32 0.0, %v1354
        %1356 = vdwg.mxu0
        %v1357 = vsel %vm1148, %v1173, -inf
        %1358 = vmax.xlane.f32.xlu0 %v1357
        %v1359 = vpop.xlane.xlu0 %1358
        %v1360 = vsel %vm1148, %v1199, -inf
        %1361 = vmax.xlane.f32.xlu0 %v1360
        %v1362 = vpop.xlane.xlu0 %1361
        %v1363 = vsel %vm1148, %v1225, -inf
        %1364 = vmax.xlane.f32.xlu0 %v1363
        %v1365 = vpop.xlane.xlu0 %1364
        %v1366 = vsel %vm1148, %v1251, -inf
        %1367 = vmax.xlane.f32.xlu0 %v1366
        %v1368 = vpop.xlane.xlu0 %1367
        %v1369 = vsel %vm1148, %v1277, -inf
        %1370 = vmax.xlane.f32.xlu0 %v1369
        %v1371 = vpop.xlane.xlu0 %1370
        %v1372 = vsel %vm1148, %v1303, -inf
        %1373 = vmax.xlane.f32.xlu0 %v1372
        %v1374 = vpop.xlane.xlu0 %1373
        %v1375 = vsel %vm1148, %v1329, -inf
        %1376 = vmax.xlane.f32.xlu0 %v1375
        %v1377 = vpop.xlane.xlu0 %1376
        %v1378 = vsel %vm1148, %v1355, -inf
        %1379 = vmax.xlane.f32.xlu0 %v1378
        %v1380 = vpop.xlane.xlu0 %1379
        %v1381 = vsub.f32 %v1173, %v1359
        %v1382 = vsub.f32 %v1199, %v1362
        %v1383 = vsub.f32 %v1225, %v1365
        %v1384 = vsub.f32 %v1251, %v1368
        %v1385 = vsub.f32 %v1277, %v1371
        %v1386 = vsub.f32 %v1303, %v1374
        %v1387 = vsub.f32 %v1329, %v1377
        %v1388 = vsub.f32 %v1355, %v1380
        %v1389 = vmul.f32 %v1381, 1.442695
        %v1390 = vpow.pop %v1389
        %v1391 = vmul.f32 %v1382, 1.442695
        %v1392 = vpow.pop %v1391
        %v1393 = vmul.f32 %v1383, 1.442695
        %v1394 = vpow.pop %v1393
        %v1395 = vmul.f32 %v1384, 1.442695
        %v1396 = vpow.pop %v1395
        %v1397 = vmul.f32 %v1385, 1.442695
        %v1398 = vpow.pop %v1397
        %v1399 = vmul.f32 %v1386, 1.442695
        %v1400 = vpow.pop %v1399
        %v1401 = vmul.f32 %v1387, 1.442695
        %v1402 = vpow.pop %v1401
        %v1403 = vmul.f32 %v1388, 1.442695
        %v1404 = vpow.pop %v1403
        %v1405 = vsel %vm1148, %v1390, 0.0
        %1406 = vadd.xlane.f32.xlu0 %v1405
        %v1407 = vpop.xlane.xlu0 %1406
        %v1408 = vsel %vm1148, %v1392, 0.0
        %1409 = vadd.xlane.f32.xlu0 %v1408
        %v1410 = vpop.xlane.xlu0 %1409
        %v1411 = vsel %vm1148, %v1394, 0.0
        %1412 = vadd.xlane.f32.xlu0 %v1411
        %v1413 = vpop.xlane.xlu0 %1412
        %v1414 = vsel %vm1148, %v1396, 0.0
        %1415 = vadd.xlane.f32.xlu0 %v1414
        %v1416 = vpop.xlane.xlu0 %1415
        %v1417 = vsel %vm1148, %v1398, 0.0
        %1418 = vadd.xlane.f32.xlu0 %v1417
        %v1419 = vpop.xlane.xlu0 %1418
        %v1420 = vsel %vm1148, %v1400, 0.0
        %1421 = vadd.xlane.f32.xlu0 %v1420
        %v1422 = vpop.xlane.xlu0 %1421
        %v1423 = vsel %vm1148, %v1402, 0.0
        %1424 = vadd.xlane.f32.xlu0 %v1423
        %v1425 = vpop.xlane.xlu0 %1424
        %v1426 = vsel %vm1148, %v1404, 0.0
        %1427 = vadd.xlane.f32.xlu0 %v1426
        %v1428 = vpop.xlane.xlu0 %1427
        %v1429 = vrcp.pop %v1407
        %v1430 = vmul.f32 %v1407, %v1429
        %v1431 = vsub.f32 1.0, %v1430
        %v1432 = vmul.f32 %v1429, %v1431
        %v1433 = vadd.f32 %v1429, %v1432
        %vm1434 = vweird.f32 %v1407
        %vm1435 = vweird.f32 %v1429
        %vm1436 = vmor %vm1434, %vm1435
        %v1437 = vsel %vm1436, %v1429, %v1433
        %v1438 = vand.u32 2147483647, %v1407
        %vm1439 = vcmp.eq.f32.partialorder %v1438, 8.507059e+37
        %v1440 = vand.u32 %v1407, 2147483648
        %v1441 = vor.u32 1.1754944e-38, %v1440
        %v1442 = vsel %vm1439, %v1441, %v1437
        %v1443 = vmul.f32 1.0, %v1442
        %v1444 = vrcp.pop %v1410
        %v1445 = vmul.f32 %v1410, %v1444
        %v1446 = vsub.f32 1.0, %v1445
        %v1447 = vmul.f32 %v1444, %v1446
        %v1448 = vadd.f32 %v1444, %v1447
        %vm1449 = vweird.f32 %v1410
        %vm1450 = vweird.f32 %v1444
        %vm1451 = vmor %vm1449, %vm1450
        %v1452 = vsel %vm1451, %v1444, %v1448
        %v1453 = vand.u32 2147483647, %v1410
        %vm1454 = vcmp.eq.f32.partialorder %v1453, 8.507059e+37
        %v1455 = vand.u32 %v1410, 2147483648
        %v1456 = vor.u32 1.1754944e-38, %v1455
        %v1457 = vsel %vm1454, %v1456, %v1452
        %v1458 = vmul.f32 1.0, %v1457
        %v1459 = vrcp.pop %v1413
        %v1460 = vmul.f32 %v1413, %v1459
        %v1461 = vsub.f32 1.0, %v1460
        %v1462 = vmul.f32 %v1459, %v1461
        %v1463 = vadd.f32 %v1459, %v1462
        %vm1464 = vweird.f32 %v1413
        %vm1465 = vweird.f32 %v1459
        %vm1466 = vmor %vm1464, %vm1465
        %v1467 = vsel %vm1466, %v1459, %v1463
        %v1468 = vand.u32 2147483647, %v1413
        %vm1469 = vcmp.eq.f32.partialorder %v1468, 8.507059e+37
        %v1470 = vand.u32 %v1413, 2147483648
        %v1471 = vor.u32 1.1754944e-38, %v1470
        %v1472 = vsel %vm1469, %v1471, %v1467
        %v1473 = vmul.f32 1.0, %v1472
        %v1474 = vrcp.pop %v1416
        %v1475 = vmul.f32 %v1416, %v1474
        %v1476 = vsub.f32 1.0, %v1475
        %v1477 = vmul.f32 %v1474, %v1476
        %v1478 = vadd.f32 %v1474, %v1477
        %vm1479 = vweird.f32 %v1416
        %vm1480 = vweird.f32 %v1474
        %vm1481 = vmor %vm1479, %vm1480
        %v1482 = vsel %vm1481, %v1474, %v1478
        %v1483 = vand.u32 2147483647, %v1416
        %vm1484 = vcmp.eq.f32.partialorder %v1483, 8.507059e+37
        %v1485 = vand.u32 %v1416, 2147483648
        %v1486 = vor.u32 1.1754944e-38, %v1485
        %v1487 = vsel %vm1484, %v1486, %v1482
        %v1488 = vmul.f32 1.0, %v1487
        %v1489 = vrcp.pop %v1419
        %v1490 = vmul.f32 %v1419, %v1489
        %v1491 = vsub.f32 1.0, %v1490
        %v1492 = vmul.f32 %v1489, %v1491
        %v1493 = vadd.f32 %v1489, %v1492
        %vm1494 = vweird.f32 %v1419
        %vm1495 = vweird.f32 %v1489
        %vm1496 = vmor %vm1494, %vm1495
        %v1497 = vsel %vm1496, %v1489, %v1493
        %v1498 = vand.u32 2147483647, %v1419
        %vm1499 = vcmp.eq.f32.partialorder %v1498, 8.507059e+37
        %v1500 = vand.u32 %v1419, 2147483648
        %v1501 = vor.u32 1.1754944e-38, %v1500
        %v1502 = vsel %vm1499, %v1501, %v1497
        %v1503 = vmul.f32 1.0, %v1502
        %v1504 = vrcp.pop %v1422
        %v1505 = vmul.f32 %v1422, %v1504
        %v1506 = vsub.f32 1.0, %v1505
        %v1507 = vmul.f32 %v1504, %v1506
        %v1508 = vadd.f32 %v1504, %v1507
        %vm1509 = vweird.f32 %v1422
        %vm1510 = vweird.f32 %v1504
        %vm1511 = vmor %vm1509, %vm1510
        %v1512 = vsel %vm1511, %v1504, %v1508
        %v1513 = vand.u32 2147483647, %v1422
        %vm1514 = vcmp.eq.f32.partialorder %v1513, 8.507059e+37
        %v1515 = vand.u32 %v1422, 2147483648
        %v1516 = vor.u32 1.1754944e-38, %v1515
        %v1517 = vsel %vm1514, %v1516, %v1512
        %v1518 = vmul.f32 1.0, %v1517
        %v1519 = vrcp.pop %v1425
        %v1520 = vmul.f32 %v1425, %v1519
        %v1521 = vsub.f32 1.0, %v1520
        %v1522 = vmul.f32 %v1519, %v1521
        %v1523 = vadd.f32 %v1519, %v1522
        %vm1524 = vweird.f32 %v1425
        %vm1525 = vweird.f32 %v1519
        %vm1526 = vmor %vm1524, %vm1525
        %v1527 = vsel %vm1526, %v1519, %v1523
        %v1528 = vand.u32 2147483647, %v1425
        %vm1529 = vcmp.eq.f32.partialorder %v1528, 8.507059e+37
        %v1530 = vand.u32 %v1425, 2147483648
        %v1531 = vor.u32 1.1754944e-38, %v1530
        %v1532 = vsel %vm1529, %v1531, %v1527
        %v1533 = vmul.f32 1.0, %v1532
        %v1534 = vrcp.pop %v1428
        %v1535 = vmul.f32 %v1428, %v1534
        %v1536 = vsub.f32 1.0, %v1535
        %v1537 = vmul.f32 %v1534, %v1536
        %v1538 = vadd.f32 %v1534, %v1537
        %vm1539 = vweird.f32 %v1428
        %vm1540 = vweird.f32 %v1534
        %vm1541 = vmor %vm1539, %vm1540
        %v1542 = vsel %vm1541, %v1534, %v1538
        %v1543 = vand.u32 2147483647, %v1428
        %vm1544 = vcmp.eq.f32.partialorder %v1543, 8.507059e+37
        %v1545 = vand.u32 %v1428, 2147483648
        %v1546 = vor.u32 1.1754944e-38, %v1545
        %v1547 = vsel %vm1544, %v1546, %v1542
        %v1548 = vmul.f32 1.0, %v1547
        %v1549 = vmul.f32 %v1390, %v1443
        %v1550 = vmul.f32 %v1392, %v1458
        %v1551 = vmul.f32 %v1394, %v1473
        %v1552 = vmul.f32 %v1396, %v1488
        %v1553 = vmul.f32 %v1398, %v1503
        %v1554 = vmul.f32 %v1400, %v1518
        %v1555 = vmul.f32 %v1402, %v1533
        %v1556 = vmul.f32 %v1404, %v1548
        %v1558 = vsel %vm1148, %v1549, 0
        %1560 = vmatpush.msra.mxu0 0.0
        %1561 = vmatpush.msra.mxu0 0.0
        %1562 = vmatpush.msra.mxu0 0.0
        %1563 = vmatpush.msra.mxu0 0.0
        %1564 = vmatpush.msra.mxu0 0.0
        %1565 = vmatpush.msra.mxu0 0.0
        %1566 = vmatpush.msra.mxu0 0.0
        %1567 = vmatpush.msra.mxu0 0.0
        %1568 = vmatpush.msra.mxu0 0.0
        %1569 = vmatpush.msra.mxu0 0.0
        %1570 = vmatpush.msra.mxu0 0.0
        %1571 = vmatpush.msra.mxu0 0.0
        %1572 = vmatpush.msra.mxu0 0.0
        %1573 = vmatpush.msra.mxu0 0.0
        %1574 = vmatpush.msra.mxu0 0.0
        %1575 = vmatpush.msra.mxu0 %v1006
        %1576 = vmatmul.f32.gmra.mxu0 %v1558
        %v1577 = vpop.f32.mrf.mxu0
        %v1578 = vadd.f32 0.0, %v1577
        %1579 = vdwg.mxu0
        %v1581 = vsel %vm1148, %v1550, 0
        %1583 = vmatpush.msra.mxu0 0.0
        %1584 = vmatpush.msra.mxu0 0.0
        %1585 = vmatpush.msra.mxu0 0.0
        %1586 = vmatpush.msra.mxu0 0.0
        %1587 = vmatpush.msra.mxu0 0.0
        %1588 = vmatpush.msra.mxu0 0.0
        %1589 = vmatpush.msra.mxu0 0.0
        %1590 = vmatpush.msra.mxu0 0.0
        %1591 = vmatpush.msra.mxu0 0.0
        %1592 = vmatpush.msra.mxu0 0.0
        %1593 = vmatpush.msra.mxu0 0.0
        %1594 = vmatpush.msra.mxu0 0.0
        %1595 = vmatpush.msra.mxu0 0.0
        %1596 = vmatpush.msra.mxu0 0.0
        %1597 = vmatpush.msra.mxu0 0.0
        %1598 = vmatpush.msra.mxu0 %v1026
        %1599 = vmatmul.f32.gmra.mxu0 %v1581
        %v1600 = vpop.f32.mrf.mxu0
        %v1601 = vadd.f32 0.0, %v1600
        %1602 = vdwg.mxu0
        %v1604 = vsel %vm1148, %v1551, 0
        %1606 = vmatpush.msra.mxu0 0.0
        %1607 = vmatpush.msra.mxu0 0.0
        %1608 = vmatpush.msra.mxu0 0.0
        %1609 = vmatpush.msra.mxu0 0.0
        %1610 = vmatpush.msra.mxu0 0.0
        %1611 = vmatpush.msra.mxu0 0.0
        %1612 = vmatpush.msra.mxu0 0.0
        %1613 = vmatpush.msra.mxu0 0.0
        %1614 = vmatpush.msra.mxu0 0.0
        %1615 = vmatpush.msra.mxu0 0.0
        %1616 = vmatpush.msra.mxu0 0.0
        %1617 = vmatpush.msra.mxu0 0.0
        %1618 = vmatpush.msra.mxu0 0.0
        %1619 = vmatpush.msra.mxu0 0.0
        %1620 = vmatpush.msra.mxu0 0.0
        %1621 = vmatpush.msra.mxu0 %v1046
        %1622 = vmatmul.f32.gmra.mxu0 %v1604
        %v1623 = vpop.f32.mrf.mxu0
        %v1624 = vadd.f32 0.0, %v1623
        %1625 = vdwg.mxu0
        %v1627 = vsel %vm1148, %v1552, 0
        %1629 = vmatpush.msra.mxu0 0.0
        %1630 = vmatpush.msra.mxu0 0.0
        %1631 = vmatpush.msra.mxu0 0.0
        %1632 = vmatpush.msra.mxu0 0.0
        %1633 = vmatpush.msra.mxu0 0.0
        %1634 = vmatpush.msra.mxu0 0.0
        %1635 = vmatpush.msra.mxu0 0.0
        %1636 = vmatpush.msra.mxu0 0.0
        %1637 = vmatpush.msra.mxu0 0.0
        %1638 = vmatpush.msra.mxu0 0.0
        %1639 = vmatpush.msra.mxu0 0.0
        %1640 = vmatpush.msra.mxu0 0.0
        %1641 = vmatpush.msra.mxu0 0.0
        %1642 = vmatpush.msra.mxu0 0.0
        %1643 = vmatpush.msra.mxu0 0.0
        %1644 = vmatpush.msra.mxu0 %v1066
        %1645 = vmatmul.f32.gmra.mxu0 %v1627
        %v1646 = vpop.f32.mrf.mxu0
        %v1647 = vadd.f32 0.0, %v1646
        %1648 = vdwg.mxu0
        %v1650 = vsel %vm1148, %v1553, 0
        %1652 = vmatpush.msra.mxu0 0.0
        %1653 = vmatpush.msra.mxu0 0.0
        %1654 = vmatpush.msra.mxu0 0.0
        %1655 = vmatpush.msra.mxu0 0.0
        %1656 = vmatpush.msra.mxu0 0.0
        %1657 = vmatpush.msra.mxu0 0.0
        %1658 = vmatpush.msra.mxu0 0.0
        %1659 = vmatpush.msra.mxu0 0.0
        %1660 = vmatpush.msra.mxu0 0.0
        %1661 = vmatpush.msra.mxu0 0.0
        %1662 = vmatpush.msra.mxu0 0.0
        %1663 = vmatpush.msra.mxu0 0.0
        %1664 = vmatpush.msra.mxu0 0.0
        %1665 = vmatpush.msra.mxu0 0.0
        %1666 = vmatpush.msra.mxu0 0.0
        %1667 = vmatpush.msra.mxu0 %v1086
        %1668 = vmatmul.f32.gmra.mxu0 %v1650
        %v1669 = vpop.f32.mrf.mxu0
        %v1670 = vadd.f32 0.0, %v1669
        %1671 = vdwg.mxu0
        %v1673 = vsel %vm1148, %v1554, 0
        %1675 = vmatpush.msra.mxu0 0.0
        %1676 = vmatpush.msra.mxu0 0.0
        %1677 = vmatpush.msra.mxu0 0.0
        %1678 = vmatpush.msra.mxu0 0.0
        %1679 = vmatpush.msra.mxu0 0.0
        %1680 = vmatpush.msra.mxu0 0.0
        %1681 = vmatpush.msra.mxu0 0.0
        %1682 = vmatpush.msra.mxu0 0.0
        %1683 = vmatpush.msra.mxu0 0.0
        %1684 = vmatpush.msra.mxu0 0.0
        %1685 = vmatpush.msra.mxu0 0.0
        %1686 = vmatpush.msra.mxu0 0.0
        %1687 = vmatpush.msra.mxu0 0.0
        %1688 = vmatpush.msra.mxu0 0.0
        %1689 = vmatpush.msra.mxu0 0.0
        %1690 = vmatpush.msra.mxu0 %v1106
        %1691 = vmatmul.f32.gmra.mxu0 %v1673
        %v1692 = vpop.f32.mrf.mxu0
        %v1693 = vadd.f32 0.0, %v1692
        %1694 = vdwg.mxu0
        %v1696 = vsel %vm1148, %v1555, 0
        %1698 = vmatpush.msra.mxu0 0.0
        %1699 = vmatpush.msra.mxu0 0.0
        %1700 = vmatpush.msra.mxu0 0.0
        %1701 = vmatpush.msra.mxu0 0.0
        %1702 = vmatpush.msra.mxu0 0.0
        %1703 = vmatpush.msra.mxu0 0.0
        %1704 = vmatpush.msra.mxu0 0.0
        %1705 = vmatpush.msra.mxu0 0.0
        %1706 = vmatpush.msra.mxu0 0.0
        %1707 = vmatpush.msra.mxu0 0.0
        %1708 = vmatpush.msra.mxu0 0.0
        %1709 = vmatpush.msra.mxu0 0.0
        %1710 = vmatpush.msra.mxu0 0.0
        %1711 = vmatpush.msra.mxu0 0.0
        %1712 = vmatpush.msra.mxu0 0.0
        %1713 = vmatpush.msra.mxu0 %v1126
        %1714 = vmatmul.f32.gmra.mxu0 %v1696
        %v1715 = vpop.f32.mrf.mxu0
        %v1716 = vadd.f32 0.0, %v1715
        %1717 = vdwg.mxu0
        %v1719 = vsel %vm1148, %v1556, 0
        %1721 = vmatpush.msra.mxu0 0.0
        %1722 = vmatpush.msra.mxu0 0.0
        %1723 = vmatpush.msra.mxu0 0.0
        %1724 = vmatpush.msra.mxu0 0.0
        %1725 = vmatpush.msra.mxu0 0.0
        %1726 = vmatpush.msra.mxu0 0.0
        %1727 = vmatpush.msra.mxu0 0.0
        %1728 = vmatpush.msra.mxu0 0.0
        %1729 = vmatpush.msra.mxu0 0.0
        %1730 = vmatpush.msra.mxu0 0.0
        %1731 = vmatpush.msra.mxu0 0.0
        %1732 = vmatpush.msra.mxu0 0.0
        %1733 = vmatpush.msra.mxu0 0.0
        %1734 = vmatpush.msra.mxu0 0.0
        %1735 = vmatpush.msra.mxu0 0.0
        %1736 = vmatpush.msra.mxu0 %v1146
        %1737 = vmatmul.f32.gmra.mxu0 %v1719
        %v1738 = vpop.f32.mrf.mxu0
        %v1739 = vadd.f32 0.0, %v1738
        %1740 = vdwg.mxu0
        %v1741 = vld [vmem:[%s7] sm:$0xff]
        %v1742 = vld [vmem:[%s7 + $0x8] sm:$0xff]
        %v1743 = vld [vmem:[%s7 + $0x10] sm:$0xff]
        %v1744 = vld [vmem:[%s7 + $0x18] sm:$0xff]
        %v1745 = vld [vmem:[%s7 + $0x20] sm:$0xff]
        %v1746 = vld [vmem:[%s7 + $0x28] sm:$0xff]
        %v1747 = vld [vmem:[%s7 + $0x30] sm:$0xff]
        %v1748 = vld [vmem:[%s7 + $0x38] sm:$0xff]
        %v1750 = vsel %vm1148, %v1578, 0
        %1752 = vmatpush.msra.mxu0 0.0
        %1753 = vmatpush.msra.mxu0 0.0
        %1754 = vmatpush.msra.mxu0 0.0
        %1755 = vmatpush.msra.mxu0 0.0
        %1756 = vmatpush.msra.mxu0 0.0
        %1757 = vmatpush.msra.mxu0 0.0
        %1758 = vmatpush.msra.mxu0 0.0
        %1759 = vmatpush.msra.mxu0 0.0
        %1760 = vmatpush.msra.mxu0 0.0
        %1761 = vmatpush.msra.mxu0 0.0
        %1762 = vmatpush.msra.mxu0 0.0
        %1763 = vmatpush.msra.mxu0 0.0
        %1764 = vmatpush.msra.mxu0 0.0
        %1765 = vmatpush.msra.mxu0 0.0
        %1766 = vmatpush.msra.mxu0 0.0
        %1767 = vmatpush.msra.mxu0 %v1741
        %1768 = vmatmul.f32.gmra.mxu0 %v1750
        %v1769 = vpop.f32.mrf.mxu0
        %v1770 = vadd.f32 0.0, %v1769
        %1771 = vdwg.mxu0
        %v1773 = vsel %vm1148, %v1601, 0
        %1775 = vmatpush.msra.mxu0 0.0
        %1776 = vmatpush.msra.mxu0 0.0
        %1777 = vmatpush.msra.mxu0 0.0
        %1778 = vmatpush.msra.mxu0 0.0
        %1779 = vmatpush.msra.mxu0 0.0
        %1780 = vmatpush.msra.mxu0 0.0
        %1781 = vmatpush.msra.mxu0 0.0
        %1782 = vmatpush.msra.mxu0 0.0
        %1783 = vmatpush.msra.mxu0 0.0
        %1784 = vmatpush.msra.mxu0 0.0
        %1785 = vmatpush.msra.mxu0 0.0
        %1786 = vmatpush.msra.mxu0 0.0
        %1787 = vmatpush.msra.mxu0 0.0
        %1788 = vmatpush.msra.mxu0 0.0
        %1789 = vmatpush.msra.mxu0 0.0
        %1790 = vmatpush.msra.mxu0 %v1742
        %1791 = vmatmul.f32.gmra.mxu0 %v1773
        %v1792 = vpop.f32.mrf.mxu0
        %v1793 = vadd.f32 0.0, %v1792
        %1794 = vdwg.mxu0
        %v1796 = vsel %vm1148, %v1624, 0
        %1798 = vmatpush.msra.mxu0 0.0
        %1799 = vmatpush.msra.mxu0 0.0
        %1800 = vmatpush.msra.mxu0 0.0
        %1801 = vmatpush.msra.mxu0 0.0
        %1802 = vmatpush.msra.mxu0 0.0
        %1803 = vmatpush.msra.mxu0 0.0
        %1804 = vmatpush.msra.mxu0 0.0
        %1805 = vmatpush.msra.mxu0 0.0
        %1806 = vmatpush.msra.mxu0 0.0
        %1807 = vmatpush.msra.mxu0 0.0
        %1808 = vmatpush.msra.mxu0 0.0
        %1809 = vmatpush.msra.mxu0 0.0
        %1810 = vmatpush.msra.mxu0 0.0
        %1811 = vmatpush.msra.mxu0 0.0
        %1812 = vmatpush.msra.mxu0 0.0
        %1813 = vmatpush.msra.mxu0 %v1743
        %1814 = vmatmul.f32.gmra.mxu0 %v1796
        %v1815 = vpop.f32.mrf.mxu0
        %v1816 = vadd.f32 0.0, %v1815
        %1817 = vdwg.mxu0
        %v1819 = vsel %vm1148, %v1647, 0
        %1821 = vmatpush.msra.mxu0 0.0
        %1822 = vmatpush.msra.mxu0 0.0
        %1823 = vmatpush.msra.mxu0 0.0
        %1824 = vmatpush.msra.mxu0 0.0
        %1825 = vmatpush.msra.mxu0 0.0
        %1826 = vmatpush.msra.mxu0 0.0
        %1827 = vmatpush.msra.mxu0 0.0
        %1828 = vmatpush.msra.mxu0 0.0
        %1829 = vmatpush.msra.mxu0 0.0
        %1830 = vmatpush.msra.mxu0 0.0
        %1831 = vmatpush.msra.mxu0 0.0
        %1832 = vmatpush.msra.mxu0 0.0
        %1833 = vmatpush.msra.mxu0 0.0
        %1834 = vmatpush.msra.mxu0 0.0
        %1835 = vmatpush.msra.mxu0 0.0
        %1836 = vmatpush.msra.mxu0 %v1744
        %1837 = vmatmul.f32.gmra.mxu0 %v1819
        %v1838 = vpop.f32.mrf.mxu0
        %v1839 = vadd.f32 0.0, %v1838
        %1840 = vdwg.mxu0
        %v1842 = vsel %vm1148, %v1670, 0
        %1844 = vmatpush.msra.mxu0 0.0
        %1845 = vmatpush.msra.mxu0 0.0
        %1846 = vmatpush.msra.mxu0 0.0
        %1847 = vmatpush.msra.mxu0 0.0
        %1848 = vmatpush.msra.mxu0 0.0
        %1849 = vmatpush.msra.mxu0 0.0
        %1850 = vmatpush.msra.mxu0 0.0
        %1851 = vmatpush.msra.mxu0 0.0
        %1852 = vmatpush.msra.mxu0 0.0
        %1853 = vmatpush.msra.mxu0 0.0
        %1854 = vmatpush.msra.mxu0 0.0
        %1855 = vmatpush.msra.mxu0 0.0
        %1856 = vmatpush.msra.mxu0 0.0
        %1857 = vmatpush.msra.mxu0 0.0
        %1858 = vmatpush.msra.mxu0 0.0
        %1859 = vmatpush.msra.mxu0 %v1745
        %1860 = vmatmul.f32.gmra.mxu0 %v1842
        %v1861 = vpop.f32.mrf.mxu0
        %v1862 = vadd.f32 0.0, %v1861
        %1863 = vdwg.mxu0
        %v1865 = vsel %vm1148, %v1693, 0
        %1867 = vmatpush.msra.mxu0 0.0
        %1868 = vmatpush.msra.mxu0 0.0
        %1869 = vmatpush.msra.mxu0 0.0
        %1870 = vmatpush.msra.mxu0 0.0
        %1871 = vmatpush.msra.mxu0 0.0
        %1872 = vmatpush.msra.mxu0 0.0
        %1873 = vmatpush.msra.mxu0 0.0
        %1874 = vmatpush.msra.mxu0 0.0
        %1875 = vmatpush.msra.mxu0 0.0
        %1876 = vmatpush.msra.mxu0 0.0
        %1877 = vmatpush.msra.mxu0 0.0
        %1878 = vmatpush.msra.mxu0 0.0
        %1879 = vmatpush.msra.mxu0 0.0
        %1880 = vmatpush.msra.mxu0 0.0
        %1881 = vmatpush.msra.mxu0 0.0
        %1882 = vmatpush.msra.mxu0 %v1746
        %1883 = vmatmul.f32.gmra.mxu0 %v1865
        %v1884 = vpop.f32.mrf.mxu0
        %v1885 = vadd.f32 0.0, %v1884
        %1886 = vdwg.mxu0
        %v1888 = vsel %vm1148, %v1716, 0
        %1890 = vmatpush.msra.mxu0 0.0
        %1891 = vmatpush.msra.mxu0 0.0
        %1892 = vmatpush.msra.mxu0 0.0
        %1893 = vmatpush.msra.mxu0 0.0
        %1894 = vmatpush.msra.mxu0 0.0
        %1895 = vmatpush.msra.mxu0 0.0
        %1896 = vmatpush.msra.mxu0 0.0
        %1897 = vmatpush.msra.mxu0 0.0
        %1898 = vmatpush.msra.mxu0 0.0
        %1899 = vmatpush.msra.mxu0 0.0
        %1900 = vmatpush.msra.mxu0 0.0
        %1901 = vmatpush.msra.mxu0 0.0
        %1902 = vmatpush.msra.mxu0 0.0
        %1903 = vmatpush.msra.mxu0 0.0
        %1904 = vmatpush.msra.mxu0 0.0
        %1905 = vmatpush.msra.mxu0 %v1747
        %1906 = vmatmul.f32.gmra.mxu0 %v1888
        %v1907 = vpop.f32.mrf.mxu0
        %v1908 = vadd.f32 0.0, %v1907
        %1909 = vdwg.mxu0
        %v1911 = vsel %vm1148, %v1739, 0
        %1913 = vmatpush.msra.mxu0 0.0
        %1914 = vmatpush.msra.mxu0 0.0
        %1915 = vmatpush.msra.mxu0 0.0
        %1916 = vmatpush.msra.mxu0 0.0
        %1917 = vmatpush.msra.mxu0 0.0
        %1918 = vmatpush.msra.mxu0 0.0
        %1919 = vmatpush.msra.mxu0 0.0
        %1920 = vmatpush.msra.mxu0 0.0
        %1921 = vmatpush.msra.mxu0 0.0
        %1922 = vmatpush.msra.mxu0 0.0
        %1923 = vmatpush.msra.mxu0 0.0
        %1924 = vmatpush.msra.mxu0 0.0
        %1925 = vmatpush.msra.mxu0 0.0
        %1926 = vmatpush.msra.mxu0 0.0
        %1927 = vmatpush.msra.mxu0 0.0
        %1928 = vmatpush.msra.mxu0 %v1748
        %1929 = vmatmul.f32.gmra.mxu0 %v1911
        %v1930 = vpop.f32.mrf.mxu0
        %v1931 = vadd.f32 0.0, %v1930
        %1932 = vdwg.mxu0
        %v1933 = vsel %vm550, %v1770, 0.0
        %v1934 = vsel %vm550, %v1793, 0.0
        %v1935 = vadd.f32 %v1933, %v1934
        %v1936 = vsel %vm550, %v1816, 0.0
        %v1937 = vadd.f32 %v1935, %v1936
        %v1938 = vsel %vm550, %v1839, 0.0
        %v1939 = vadd.f32 %v1937, %v1938
        %v1940 = vsel %vm550, %v1862, 0.0
        %v1941 = vsel %vm550, %v1885, 0.0
        %v1942 = vadd.f32 %v1940, %v1941
        %v1943 = vsel %vm550, %v1908, 0.0
        %v1944 = vadd.f32 %v1942, %v1943
        %v1945 = vsel %vm550, %v1931, 0.0
        %v1946 = vadd.f32 %v1944, %v1945
        %v1947 = vld [vmem:[%s8] sm:$0x3]
        %v1949 = vrot.slane %v1947, 1
        %v1950 = vperm.slane %v1947, 0
        %v1951 = vperm.slane %v1949, 0
        %v1954 = vadd.f32 %v1939, %v1950
        %v1955 = vadd.f32 %v1946, %v1951
        %v1956 = vadd.f32 %v1954, %v492
        %v1957 = vadd.f32 %v1955, %v492
        %v1958 = vsel %vm550, %v1956, 0.0
        %1959 = vadd.xlane.f32.xlu0 %v1958
        %v1960 = vpop.xlane.xlu0 %1959
        %v1961 = vsel %vm550, %v1957, 0.0
        %1962 = vadd.xlane.f32.xlu0 %v1961
        %v1963 = vpop.xlane.xlu0 %1962
        %v1964 = vrcp.pop 32.0
        %v1965 = vmul.f32 32.0, %v1964
        %v1966 = vsub.f32 1.0, %v1965
        %v1967 = vmul.f32 %v1964, %v1966
        %v1968 = vadd.f32 %v1964, %v1967
        %vm1969 = vweird.f32 %v1964
        %v1970 = vsel %vm1969, %v1964, %v1968
        %v1971 = vmul.f32 %v1960, %v1970
        %v1972 = vmul.f32 %v1963, %v1970
        %v1973 = vmul.f32 %v1956, %v1956
        %v1974 = vmul.f32 %v1957, %v1957
        %v1975 = vsel %vm550, %v1973, 0.0
        %1976 = vadd.xlane.f32.xlu0 %v1975
        %v1977 = vpop.xlane.xlu0 %1976
        %v1978 = vsel %vm550, %v1974, 0.0
        %1979 = vadd.xlane.f32.xlu0 %v1978
        %v1980 = vpop.xlane.xlu0 %1979
        %v1981 = vmul.f32 %v1977, %v1970
        %v1982 = vmul.f32 %v1980, %v1970
        %v1983 = vmul.f32 %v1971, %v1971
        %v1984 = vmul.f32 %v1972, %v1972
        %v1985 = vsub.f32 %v1981, %v1983
        %v1986 = vsub.f32 %v1982, %v1984
        %v1987 = vsub.f32 %v1956, %v1971
        %v1988 = vsub.f32 %v1957, %v1972
        %v1989 = vadd.f32 %v1985, 1e-05
        %v1990 = vadd.f32 %v1986, 1e-05
        %v1991 = vrsqrt.pop %v1989
        %v1992 = vmul.f32 %v1991, %v1989
        %v1993 = vmul.f32 %v1992, %v1991
        %v1994 = vmul.f32 0.5, %v1993
        %v1995 = vsub.f32 1.5, %v1994
        %v1996 = vmul.f32 %v1991, %v1995
        %vm1997 = vweird.f32 %v1989
        %vm1998 = vweird.f32 %v1991
        %vm1999 = vmor %vm1997, %vm1998
        %v2000 = vsel %vm1999, %v1991, %v1996
        %v2001 = vrsqrt.pop %v1990
        %v2002 = vmul.f32 %v2001, %v1990
        %v2003 = vmul.f32 %v2002, %v2001
        %v2004 = vmul.f32 0.5, %v2003
        %v2005 = vsub.f32 1.5, %v2004
        %v2006 = vmul.f32 %v2001, %v2005
        %vm2007 = vweird.f32 %v1990
        %vm2008 = vweird.f32 %v2001
        %vm2009 = vmor %vm2007, %vm2008
        %v2010 = vsel %vm2009, %v2001, %v2006
        %v2011 = vmul.f32 %v1987, %v2000
        %v2012 = vmul.f32 %v1988, %v2010
        %v2014 = vperm.slane %v490, 0
        %v2016 = vmul.f32 %v2011, %v2014
        %v2017 = vmul.f32 %v2012, %v2014
        %v2019 = vperm.slane %v491, 0
        %v2021 = vadd.f32 %v2016, %v2019
        %v2022 = vadd.f32 %v2017, %v2019
        %v2023 = vadd.f32 %v2021, %v2022
        %v2024 = vld [vmem:[%s9] sm:$0xff]
        %v2025 = vld [vmem:[%s9 + $0x8] sm:$0xff]
        %v2026 = vld [vmem:[%s9 + $0x10] sm:$0xff]
        %v2027 = vld [vmem:[%s9 + $0x18] sm:$0xff]
        %v2028 = vld [vmem:[%s10] sm:$0x1]
        %v2030 = vperm.slane %v2028, 0
        %v2033 = vsel %vm550, %v2023, 0
        %2035 = vmatpush.msra.mxu0 0.0
        %2036 = vmatpush.msra.mxu0 0.0
        %2037 = vmatpush.msra.mxu0 0.0
        %2038 = vmatpush.msra.mxu0 0.0
        %2039 = vmatpush.msra.mxu0 0.0
        %2040 = vmatpush.msra.mxu0 0.0
        %2041 = vmatpush.msra.mxu0 0.0
        %2042 = vmatpush.msra.mxu0 0.0
        %2043 = vmatpush.msra.mxu0 0.0
        %2044 = vmatpush.msra.mxu0 0.0
        %2045 = vmatpush.msra.mxu0 0.0
        %2046 = vmatpush.msra.mxu0 0.0
        %2047 = vmatpush.msra.mxu0 %v2027
        %2048 = vmatpush.msra.mxu0 %v2026
        %2049 = vmatpush.msra.mxu0 %v2025
        %2050 = vmatpush.msra.mxu0 %v2024
        %2051 = vmatmul.f32.gmra.mxu0 %v2033
        %v2052 = vpop.f32.mrf.mxu0
        %v2053 = vadd.f32 %v2030, %v2052
        %2054 = vdwg.mxu0
        %v2055 = vld [vmem:[%s11] sm:$0xff]
        %v2056 = vld [vmem:[%s11 + $0x8] sm:$0xff]
        %v2057 = vld [vmem:[%s11 + $0x10] sm:$0xff]
        %v2058 = vld [vmem:[%s11 + $0x18] sm:$0xff]
        %v2059 = vld [vmem:[%s11 + $0x20] sm:$0xff]
        %v2060 = vld [vmem:[%s11 + $0x28] sm:$0xff]
        %v2061 = vld [vmem:[%s11 + $0x30] sm:$0xff]
        %v2062 = vld [vmem:[%s11 + $0x38] sm:$0xff]
        %v2063 = vld [vmem:[%s12] sm:$0x1]
        %v2065 = vperm.slane %v2063, 0
        %vm2067 = vcmask 523264
        %v2069 = vsel %vm2067, %v2053, 0
        %2071 = vmatpush.msra.mxu0 0.0
        %2072 = vmatpush.msra.mxu0 0.0
        %2073 = vmatpush.msra.mxu0 0.0
        %2074 = vmatpush.msra.mxu0 0.0
        %2075 = vmatpush.msra.mxu0 0.0
        %2076 = vmatpush.msra.mxu0 0.0
        %2077 = vmatpush.msra.mxu0 0.0
        %2078 = vmatpush.msra.mxu0 0.0
        %2079 = vmatpush.msra.mxu0 %v2062
        %2080 = vmatpush.msra.mxu0 %v2061
        %2081 = vmatpush.msra.mxu0 %v2060
        %2082 = vmatpush.msra.mxu0 %v2059
        %2083 = vmatpush.msra.mxu0 %v2058
        %2084 = vmatpush.msra.mxu0 %v2057
        %2085 = vmatpush.msra.mxu0 %v2056
        %2086 = vmatpush.msra.mxu0 %v2055
        %2087 = vmatmul.f32.gmra.mxu0 %v2069
        %v2088 = vpop.f32.mrf.mxu0
        %v2089 = vadd.f32 %v2065, %v2088
        %2090 = vdwg.mxu0
        %v2091 = vadd.f32 %v2089, %v2023
        %v2092 = vsel %vm550, %v2091, 0.0
        %2093 = vadd.xlane.f32.xlu0 %v2092
        %v2094 = vpop.xlane.xlu0 %2093
        %v2095 = vmul.f32 %v2094, %v1970
        %v2096 = vmul.f32 %v2091, %v2091
        %v2097 = vsel %vm550, %v2096, 0.0
        %2098 = vadd.xlane.f32.xlu0 %v2097
        %v2099 = vpop.xlane.xlu0 %2098
        %v2100 = vmul.f32 %v2099, %v1970
        %v2101 = vmul.f32 %v2095, %v2095
        %v2102 = vsub.f32 %v2100, %v2101
        %v2103 = vsub.f32 %v2091, %v2095
        %v2104 = vadd.f32 %v2102, 1e-05
        %v2105 = vrsqrt.pop %v2104
        %v2106 = vmul.f32 %v2105, %v2104
        %v2107 = vmul.f32 %v2106, %v2105
        %v2108 = vmul.f32 0.5, %v2107
        %v2109 = vsub.f32 1.5, %v2108
        %v2110 = vmul.f32 %v2105, %v2109
        %vm2111 = vweird.f32 %v2104
        %vm2112 = vweird.f32 %v2105
        %vm2113 = vmor %vm2111, %vm2112
        %v2114 = vsel %vm2113, %v2105, %v2110
        %v2115 = vmul.f32 %v2103, %v2114
        %v2116 = vmul.f32 %v2115, %v2014
        %v2117 = vadd.f32 %v2116, %v2019
        %2118 = vst.msk [vmem:[%s485] sm:$0xff] %vm550, %v2117
        %s2119 = sand.u32 %s357, 1
        %s2120 = scalar_lea.sflag [#allocation3], %s2119
        %s2121 = sand.u32 %s357, 1
        %s2122 = smul.addr %s2121, 8
        %s2123 = scalar_lea.vmem [#allocation2], %s2122
        // Predicated region
        $region81: #{tpu_custom_call.1} parent=79 // pred_check
          %p2124 = pneg %p367
        $region82: #{tpu_custom_call.1} parent=79 // pred_check_branch
          %2126 = sbr.rel (%p2124) target = $region84
        $region83: #{tpu_custom_call.1} parent=79 // pred_region
          %2128 = vsyncadd %s2120, 0
          %s2129 = smul.addr %s29, 8
          %s2130 = scalar_lea.hbm %s15, %s2129
          %s2132 = sshll.u32 %s2123, 4
          %s2133 = int_to_ptr.vmem [resolvable:$true] %s2132
          %s2134 = sshll.u32 %s2130, 4
          %s2135 = int_to_ptr.hbm [resolvable:$true] %s2134
          %2137 = dma.vmem_to_hbm [thread:$0]  %s2133, 128, %s2135, %s2120
        $region84: #{tpu_custom_call.1} parent=79 // pred_fallthru
          _
      $region80: #{tpu_custom_call.1} parent=5 // pred_fallthru
        _
      %p2138 = scmp.le.s32.totalorder 2, %s24
      // Predicated region
      $region85: #{tpu_custom_call.1} parent=5 // pred_check
        %p2139 = pneg %p2138
      $region86: #{tpu_custom_call.1} parent=5 // pred_check_branch
        %2141 = sbr.rel (%p2139) target = $region88
      $region87: #{tpu_custom_call.1} parent=5 // pred_region
        %s2142 = ssub.s32 %s24, 2
        // Predicated region
        $region89: #{tpu_custom_call.1} parent=87 // pred_check
          %p2143 = pneg %p373
        $region90: #{tpu_custom_call.1} parent=87 // pred_check_branch
          %2145 = sbr.rel (%p2143) target = $region92
        $region91: #{tpu_custom_call.1} parent=87 // pred_region
          %s2146 = sand.u32 %s358, 1
          %s2147 = scalar_lea.sflag [#allocation3], %s2146
          %s2148 = sand.u32 %s358, 1
          %s2149 = smul.addr %s2148, 8
          %s2150 = scalar_lea.vmem [#allocation2], %s2149
          %2152 = dma.done %s2147, 128
        $region92: #{tpu_custom_call.1} parent=87 // pred_fallthru
          _
      $region88: #{tpu_custom_call.1} parent=5 // pred_fallthru
        _
    $region6: #{tpu_custom_call.1} parent=1 // loop_footer
      %s28 = sadd.s32 1, %s24
    $region7: #{tpu_custom_call.1} parent=1 // loop_footer_branch
      %23 = sbr.rel target = $region3
    $region8: #{tpu_custom_call.1} parent=1 // loop_exit
      _
    %2153 = vsyncpa [#allocation3], 1
    %s2154 = scalar_lea.sflag [#allocation3], 1
    %2155 = vsyncpa %s2154, 1

</llo_original>
